<compile_context>
chip_gen: v7x
topology: tpu7x:2x2x1
jax: 0.10.0
libtpu: 0.0.40
codegen_flags: <defaults>
</compile_context>

<pallas_src>
import jax
import jax.numpy as jnp
from jax.experimental import pallas as pl
from jax.experimental.pallas import tpu as pltpu

_INV_SQRT2 = 0.7071067811865476        # 1/sqrt(2), exact-GELU constant
_SQRT_2_OVER_PI = 0.7978845608028654   # sqrt(2/pi), tanh-GELU constant


def _gelu(x, approximate):
    if approximate:
        # tanh approximation: EUP slot instead of a long erf VALU polynomial.
        inner = _SQRT_2_OVER_PI * (x + 0.044715 * (x * x * x))
        return 0.5 * x * (1.0 + jnp.tanh(inner))
    # nn.GELU() default = exact (erf-based) GELU
    return 0.5 * x * (1.0 + jax.lax.erf(x * _INV_SQRT2))


def make_mlp_kernel(num_hidden_layers, compute_dtype, gelu_approx):
    """[Linear+GELU] * num_hidden_layers -> L2Norm -> Linear, one batch tile."""

    def kernel(*refs):
        x_ref = refs[0]
        out_ref = refs[-1]
        w_refs = refs[1:-1]     # interleaved (W, b); last pair = output Linear

        h = x_ref[...]          # already in compute_dtype (cast in the wrapper)
        for i in range(num_hidden_layers):
            w = w_refs[2 * i][...]
            b = w_refs[2 * i + 1][...]
            h = jnp.dot(h.astype(compute_dtype), w,
                        preferred_element_type=jnp.float32)
            h = _gelu(h + b.astype(jnp.float32), gelu_approx)

        # L2Norm over the feature axis, norm clamped at eps=1e-6:
        #   x / max(||x||, 1e-6) == x * min(rsqrt(sum x^2), 1e6)
        ssq = jnp.sum(h * h, axis=1, keepdims=True)
        h = h * jnp.minimum(jax.lax.rsqrt(ssq), 1e6)

        # final Linear(hidden_size, dim_out_padded)
        w_out = w_refs[-2][...]
        b_out = w_refs[-1][...]
        out = jnp.dot(h.astype(compute_dtype), w_out,
                      preferred_element_type=jnp.float32)
        out_ref[...] = (out + b_out.astype(jnp.float32)).astype(out_ref.dtype)

    return kernel


def _round_up(n, m):
    return ((n + m - 1) // m) * m


def _choose_tile_m(batch, row_align, max_tile=512):
    """Big tiles for DMA/MXU efficiency, but an even/balanced number of grid
    steps so both v7x TensorCores get real work on small batches."""
    batch_a = _round_up(max(batch, 1), row_align)
    if batch_a <= max_tile:
        half = _round_up(pl.cdiv(batch_a, 2), row_align)
        return half if half < batch_a else batch_a
    steps = pl.cdiv(batch_a, max_tile)
    if steps % 2:
        steps += 1
    return _round_up(pl.cdiv(batch_a, steps), row_align)


_SINGLE_BUFFER_WEIGHTS_OK = None   # cache: does this jax accept pl.Buffered(1)?


def _weight_spec(shape, single_buffer):
    if single_buffer:
        # Grid-invariant operand: single buffer (no pointless double-buffering).
        return pl.BlockSpec(shape, lambda i: (0, 0),
                            pipeline_mode=pl.Buffered(1))
    return pl.BlockSpec(shape, lambda i: (0, 0))


def mlp_forward(x, params, dim_out, *, tile_m=None,
                compute_dtype=jnp.bfloat16, gelu_approx=False,
                out_dtype=jnp.float32):
    """x: (batch, dim); params: interleaved [W1,b1,...,Wk,bk,W_out,b_out]."""
    params = list(params)
    num_hidden = (len(params) // 2) - 1
    batch, dim = x.shape

    # Sublane packing of the batch-tile rows (16 rows for 2-byte dtypes).
    row_align = 16 if jnp.dtype(compute_dtype).itemsize < 4 else 8
    if tile_m is None:
        tile_m = _choose_tile_m(batch, row_align)
    else:
        tile_m = _round_up(tile_m, row_align)

    # Pad batch so every grid step sees a full (tile_m, dim) block.
    batch_p = _round_up(max(batch, 1), tile_m)
    if batch_p != batch:
        x = jnp.pad(x, ((0, batch_p - batch), (0, 0)))

    # Pad input features to a lane multiple -> lane-dense x loads, K = 128*n.
    dim_p = _round_up(dim, 128)
    if dim_p != dim:
        x = jnp.pad(x, ((0, 0), (0, dim_p - dim)))
        params[0] = jnp.pad(params[0], ((0, dim_p - dim), (0, 0)))

    # Pad output features to a lane multiple -> lane-dense (unmasked) stores.
    dim_out_p = _round_up(dim_out, 128)
    if dim_out_p != dim_out:
        params[-2] = jnp.pad(params[-2], ((0, 0), (0, dim_out_p - dim_out)))
        params[-1] = jnp.pad(params[-1], ((0, 0), (0, dim_out_p - dim_out)))

    # bf16 matmul operands (x + weights); biases & accumulation stay f32.
    if compute_dtype != jnp.float32:
        x = x.astype(compute_dtype)
        for i in range(0, len(params), 2):
            params[i] = params[i].astype(compute_dtype)

    kernel = make_mlp_kernel(num_hidden, compute_dtype, gelu_approx)
    flat_inputs = [x] + params
    grid = (batch_p // tile_m,)

    # Advisory cost estimate for XLA scheduling around the fused call.
    widths = [params[2 * i].shape[1] for i in range(len(params) // 2)]
    weight_bytes = sum(int(p.size) * p.dtype.itemsize for p in params)
    flops = sum(2 * batch_p * params[2 * i].shape[0] * params[2 * i].shape[1]
                for i in range(len(params) // 2))
    transcendentals = batch_p * (sum(widths[:-1]) + 1)   # GELUs + rsqrt per row
    bytes_accessed = (int(x.size) * x.dtype.itemsize + weight_bytes
                      + batch_p * dim_out_p * jnp.dtype(out_dtype).itemsize)
    cost = pl.CostEstimate(flops=flops, transcendentals=transcendentals,
                           bytes_accessed=bytes_accessed)

    in_x_spec = pl.BlockSpec((tile_m, dim_p), lambda i: (i, 0))
    out_specs = pl.BlockSpec((tile_m, dim_out_p), lambda i: (i, 0))
    out_shape = jax.ShapeDtypeStruct((batch_p, dim_out_p), out_dtype)

    def _run(single_buffer):
        in_specs = [in_x_spec] + [_weight_spec(p.shape, single_buffer)
                                  for p in params]
        # VMEM budget: double-buffered x/out tiles, resident weights, f32
        # intermediates; headroom-capped at v7x's 64 MiB physical VMEM so
        # larger tiles/hidden sizes don't trip the 16/32 MiB scoped defaults.
        x_tile_b = tile_m * dim_p * x.dtype.itemsize
        out_tile_b = tile_m * dim_out_p * jnp.dtype(out_dtype).itemsize
        act_b = 4 * tile_m * max(widths + [dim_p]) * 4
        est = (2 * x_tile_b + 2 * out_tile_b
               + (1 if single_buffer else 2) * weight_bytes + act_b)
        vmem_limit = int(min(64 * 1024 * 1024, max(32 * 1024 * 1024, 2 * est)))
        return pl.pallas_call(
            kernel,
            out_shape=out_shape,
            grid=grid,
            in_specs=in_specs,
            out_specs=out_specs,
            compiler_params=pltpu.CompilerParams(
                dimension_semantics=("parallel",),   # batch across TCs on v7x
                vmem_limit_bytes=vmem_limit,
            ),
            cost_estimate=cost,
        )(*flat_inputs)

    global _SINGLE_BUFFER_WEIGHTS_OK
    attempts = ([True, False] if _SINGLE_BUFFER_WEIGHTS_OK is None
                else [_SINGLE_BUFFER_WEIGHTS_OK])
    out, err = None, None
    for single_buffer in attempts:
        try:
            out = _run(single_buffer)
            _SINGLE_BUFFER_WEIGHTS_OK = single_buffer
            err = None
            break
        except Exception as e:   # fallback if pl.Buffered(1) is unsupported
            err = e
    if err is not None:
        raise err
    return out[:batch, :dim_out]


def init_mlp_params(key, dim, dim_out, num_layers, hidden_size):
    """Deterministic synthetic params matching nn.Linear shapes (transposed)."""
    dims = (dim,) + (hidden_size,) * (num_layers - 1)
    params = []
    for d_in, d_out in zip(dims[:-1], dims[1:]):
        key, k1, k2 = jax.random.split(key, 3)
        params.append(jax.random.normal(k1, (d_in, d_out), jnp.float32) * 0.05)
        params.append(jax.random.normal(k2, (1, d_out), jnp.float32) * 0.05)
    key, k1, k2 = jax.random.split(key, 3)
    params.append(jax.random.normal(k1, (hidden_size, dim_out), jnp.float32) * 0.05)
    params.append(jax.random.normal(k2, (1, dim_out), jnp.float32) * 0.05)
    return params


def mlp_reference(x, params):
    """Pure-JAX reference (f32) mirroring the PyTorch module."""
    num_hidden = (len(params) // 2) - 1
    h = x
    for i in range(num_hidden):
        h = h @ params[2 * i] + params[2 * i + 1]
        h = _gelu(h, approximate=False)
    norm = jnp.maximum(jnp.linalg.norm(h, axis=1, keepdims=True), 1e-6)
    h = h / norm
    return h @ params[-2] + params[-1]


if __name__ == "__main__":
    # Small shapes consistent with the module (hidden_size=256 is its default);
    # batch=200 exercises batch padding and the balanced 2-step grid.
    batch, dim, hidden_size, num_layers, dim_out = 200, 64, 256, 3, 16

    key = jax.random.PRNGKey(0)
    kx, kp = jax.random.split(key)
    x = jax.random.normal(kx, (batch, dim), jnp.float32)
    params = init_mlp_params(kp, dim, dim_out, num_layers, hidden_size)

    ref = mlp_reference(x, params)

    # f32 path: faithful to the PyTorch module's math -> tight tolerance.
    out_f32 = mlp_forward(x, params, dim_out, compute_dtype=jnp.float32)
    out_f32 = jax.block_until_ready(out_f32)
    assert out_f32.shape == (batch, dim_out)
    assert jnp.allclose(out_f32, ref, atol=1e-4, rtol=1e-4)

    # default bf16-operand path (f32 accumulation) -> looser tolerance.
    out_bf16 = mlp_forward(x, params, dim_out)
    out_bf16 = jax.block_until_ready(out_bf16)
    assert out_bf16.shape == (batch, dim_out)
    assert jnp.allclose(out_bf16, ref, atol=3e-2, rtol=3e-2)

    print("KERNEL_OK")
</pallas_src>

<mosaic_0001>
module attributes {stable_mosaic.version = 11 : i64} {
  func.func @kernel(%arg0: i32, %arg1: memref<104x128xf32, #tpu.memory_space<vmem>>, %arg2: memref<128x256xf32, #tpu.memory_space<vmem>>, %arg3: memref<1x256xf32, #tpu.memory_space<vmem>>, %arg4: memref<256x256xf32, #tpu.memory_space<vmem>>, %arg5: memref<1x256xf32, #tpu.memory_space<vmem>>, %arg6: memref<256x128xf32, #tpu.memory_space<vmem>>, %arg7: memref<1x128xf32, #tpu.memory_space<vmem>>, %arg8: memref<104x128xf32, #tpu.memory_space<vmem>>) attributes {dimension_semantics = [#tpu.dimension_semantics<parallel>], iteration_bounds = array<i64: 2>, scalar_prefetch = 0 : i64, scratch_operands = 0 : i64, tpu.core_type = #tpu.core_type<tc>, window_params = [{transform_indices = @transform_0, window_bounds = array<i64: 104, 128>}, {pipeline_mode = #tpu.pipeline_mode<synchronous>, transform_indices = @transform_1, window_bounds = array<i64: 128, 256>}, {pipeline_mode = #tpu.pipeline_mode<synchronous>, transform_indices = @transform_2, window_bounds = array<i64: 1, 256>}, {pipeline_mode = #tpu.pipeline_mode<synchronous>, transform_indices = @transform_3, window_bounds = array<i64: 256, 256>}, {pipeline_mode = #tpu.pipeline_mode<synchronous>, transform_indices = @transform_4, window_bounds = array<i64: 1, 256>}, {pipeline_mode = #tpu.pipeline_mode<synchronous>, transform_indices = @transform_5, window_bounds = array<i64: 256, 128>}, {pipeline_mode = #tpu.pipeline_mode<synchronous>, transform_indices = @transform_6, window_bounds = array<i64: 1, 128>}, {transform_indices = @transform_7, window_bounds = array<i64: 104, 128>}]} {
    %c0 = arith.constant 0 : index
    %c0_0 = arith.constant 0 : index
    %0 = vector.load %arg1[%c0, %c0_0] : memref<104x128xf32, #tpu.memory_space<vmem>>, vector<104x128xf32>
    %c0_1 = arith.constant 0 : index
    %c0_2 = arith.constant 0 : index
    %1 = vector.load %arg2[%c0_1, %c0_2] : memref<128x256xf32, #tpu.memory_space<vmem>>, vector<128x256xf32>
    %c0_3 = arith.constant 0 : index
    %c0_4 = arith.constant 0 : index
    %2 = vector.load %arg3[%c0_3, %c0_4] : memref<1x256xf32, #tpu.memory_space<vmem>>, vector<1x256xf32>
    %cst = arith.constant dense<0.000000e+00> : vector<104x256xf32>
    %3 = tpu.matmul %0, %1, %cst {dimension_numbers = #tpu.dot_dimension_numbers<[1], [0], [0], [1], [0, 0, 1, 1], [], []>} : vector<104x128xf32>, vector<128x256xf32>, vector<104x256xf32> -> vector<104x256xf32>
    %4 = vector.broadcast %2 : vector<1x256xf32> to vector<104x256xf32>
    %5 = arith.addf %3, %4 : vector<104x256xf32>
    %cst_5 = arith.constant 5.000000e-01 : f32
    %6 = vector.broadcast %cst_5 : f32 to vector<104x256xf32>
    %7 = arith.mulf %6, %5 : vector<104x256xf32>
    %cst_6 = arith.constant 0.707106769 : f32
    %8 = vector.broadcast %cst_6 : f32 to vector<104x256xf32>
    %9 = arith.mulf %5, %8 : vector<104x256xf32>
    %10 = math.erf %9 : vector<104x256xf32>
    %cst_7 = arith.constant 1.000000e+00 : f32
    %11 = vector.broadcast %cst_7 : f32 to vector<104x256xf32>
    %12 = arith.addf %11, %10 : vector<104x256xf32>
    %13 = arith.mulf %7, %12 : vector<104x256xf32>
    %c0_8 = arith.constant 0 : index
    %c0_9 = arith.constant 0 : index
    %14 = vector.load %arg4[%c0_8, %c0_9] : memref<256x256xf32, #tpu.memory_space<vmem>>, vector<256x256xf32>
    %c0_10 = arith.constant 0 : index
    %c0_11 = arith.constant 0 : index
    %15 = vector.load %arg5[%c0_10, %c0_11] : memref<1x256xf32, #tpu.memory_space<vmem>>, vector<1x256xf32>
    %cst_12 = arith.constant dense<0.000000e+00> : vector<104x256xf32>
    %16 = tpu.matmul %13, %14, %cst_12 {dimension_numbers = #tpu.dot_dimension_numbers<[1], [0], [0], [1], [0, 0, 1, 1], [], []>} : vector<104x256xf32>, vector<256x256xf32>, vector<104x256xf32> -> vector<104x256xf32>
    %17 = vector.broadcast %15 : vector<1x256xf32> to vector<104x256xf32>
    %18 = arith.addf %16, %17 : vector<104x256xf32>
    %cst_13 = arith.constant 5.000000e-01 : f32
    %19 = vector.broadcast %cst_13 : f32 to vector<104x256xf32>
    %20 = arith.mulf %19, %18 : vector<104x256xf32>
    %cst_14 = arith.constant 0.707106769 : f32
    %21 = vector.broadcast %cst_14 : f32 to vector<104x256xf32>
    %22 = arith.mulf %18, %21 : vector<104x256xf32>
    %23 = math.erf %22 : vector<104x256xf32>
    %cst_15 = arith.constant 1.000000e+00 : f32
    %24 = vector.broadcast %cst_15 : f32 to vector<104x256xf32>
    %25 = arith.addf %24, %23 : vector<104x256xf32>
    %26 = arith.mulf %20, %25 : vector<104x256xf32>
    %27 = arith.mulf %26, %26 : vector<104x256xf32>
    %cst_16 = arith.constant dense<0.000000e+00> : vector<104xf32>
    %28 = vector.multi_reduction <add>, %27, %cst_16 [1] : vector<104x256xf32> to vector<104xf32>
    %29 = vector.shape_cast %28 : vector<104xf32> to vector<104x1xf32>
    %30 = math.rsqrt %29 : vector<104x1xf32>
    %cst_17 = arith.constant 1.000000e+06 : f32
    %31 = vector.broadcast %cst_17 : f32 to vector<104x1xf32>
    %32 = arith.minimumf %30, %31 : vector<104x1xf32>
    %33 = vector.broadcast %32 : vector<104x1xf32> to vector<104x256xf32>
    %34 = arith.mulf %26, %33 : vector<104x256xf32>
    %c0_18 = arith.constant 0 : index
    %c0_19 = arith.constant 0 : index
    %35 = vector.load %arg6[%c0_18, %c0_19] : memref<256x128xf32, #tpu.memory_space<vmem>>, vector<256x128xf32>
    %c0_20 = arith.constant 0 : index
    %c0_21 = arith.constant 0 : index
    %36 = vector.load %arg7[%c0_20, %c0_21] : memref<1x128xf32, #tpu.memory_space<vmem>>, vector<1x128xf32>
    %cst_22 = arith.constant dense<0.000000e+00> : vector<104x128xf32>
    %37 = tpu.matmul %34, %35, %cst_22 {dimension_numbers = #tpu.dot_dimension_numbers<[1], [0], [0], [1], [0, 0, 1, 1], [], []>} : vector<104x256xf32>, vector<256x128xf32>, vector<104x128xf32> -> vector<104x128xf32>
    %38 = vector.broadcast %36 : vector<1x128xf32> to vector<104x128xf32>
    %39 = arith.addf %37, %38 : vector<104x128xf32>
    %c0_23 = arith.constant 0 : index
    %c0_24 = arith.constant 0 : index
    %40 = vector.load %arg8[%c0_23, %c0_24] : memref<104x128xf32, #tpu.memory_space<vmem>>, vector<104x128xf32>
    tpu.vector_store %arg8[%c0_23, %c0_24], %39 {strides = array<i32>} : memref<104x128xf32, #tpu.memory_space<vmem>>, vector<104x128xf32>,
    return
  }
  func.func @transform_0(%arg0: i32) -> (i32, i32) {
    %c0_i32 = arith.constant 0 : i32
    %c0_i32_0 = arith.constant 0 : i32
    return %arg0, %c0_i32 : i32, i32
  }
  func.func @transform_1(%arg0: i32) -> (i32, i32) {
    %c0_i32 = arith.constant 0 : i32
    %c0_i32_0 = arith.constant 0 : i32
    %c0_i32_1 = arith.constant 0 : i32
    return %c0_i32, %c0_i32_0 : i32, i32
  }
  func.func @transform_2(%arg0: i32) -> (i32, i32) {
    %c0_i32 = arith.constant 0 : i32
    %c0_i32_0 = arith.constant 0 : i32
    %c0_i32_1 = arith.constant 0 : i32
    return %c0_i32, %c0_i32_0 : i32, i32
  }
  func.func @transform_3(%arg0: i32) -> (i32, i32) {
    %c0_i32 = arith.constant 0 : i32
    %c0_i32_0 = arith.constant 0 : i32
    %c0_i32_1 = arith.constant 0 : i32
    return %c0_i32, %c0_i32_0 : i32, i32
  }
  func.func @transform_4(%arg0: i32) -> (i32, i32) {
    %c0_i32 = arith.constant 0 : i32
    %c0_i32_0 = arith.constant 0 : i32
    %c0_i32_1 = arith.constant 0 : i32
    return %c0_i32, %c0_i32_0 : i32, i32
  }
  func.func @transform_5(%arg0: i32) -> (i32, i32) {
    %c0_i32 = arith.constant 0 : i32
    %c0_i32_0 = arith.constant 0 : i32
    %c0_i32_1 = arith.constant 0 : i32
    return %c0_i32, %c0_i32_0 : i32, i32
  }
  func.func @transform_6(%arg0: i32) -> (i32, i32) {
    %c0_i32 = arith.constant 0 : i32
    %c0_i32_0 = arith.constant 0 : i32
    %c0_i32_1 = arith.constant 0 : i32
    return %c0_i32, %c0_i32_0 : i32, i32
  }
  func.func @transform_7(%arg0: i32) -> (i32, i32) {
    %c0_i32 = arith.constant 0 : i32
    %c0_i32_0 = arith.constant 0 : i32
    return %arg0, %c0_i32 : i32, i32
  }
}

module attributes {stable_mosaic.version = 11 : i64} {
  func.func @kernel(%arg0: i32, %arg1: memref<104x128xf32, #tpu.memory_space<vmem>>, %arg2: memref<128x256xf32, #tpu.memory_space<vmem>>, %arg3: memref<1x256xf32, #tpu.memory_space<vmem>>, %arg4: memref<256x256xf32, #tpu.memory_space<vmem>>, %arg5: memref<1x256xf32, #tpu.memory_space<vmem>>, %arg6: memref<256x128xf32, #tpu.memory_space<vmem>>, %arg7: memref<1x128xf32, #tpu.memory_space<vmem>>, %arg8: memref<104x128xf32, #tpu.memory_space<vmem>>) attributes {dimension_semantics = [#tpu.dimension_semantics<parallel>], iteration_bounds = array<i64: 2>, scalar_prefetch = 0 : i64, scratch_operands = 0 : i64, tpu.core_type = #tpu.core_type<tc>, window_params = [{transform_indices = @transform_0, window_bounds = array<i64: 104, 128>}, {pipeline_mode = #tpu.pipeline_mode<synchronous>, transform_indices = @transform_1, window_bounds = array<i64: 128, 256>}, {pipeline_mode = #tpu.pipeline_mode<synchronous>, transform_indices = @transform_2, window_bounds = array<i64: 1, 256>}, {pipeline_mode = #tpu.pipeline_mode<synchronous>, transform_indices = @transform_3, window_bounds = array<i64: 256, 256>}, {pipeline_mode = #tpu.pipeline_mode<synchronous>, transform_indices = @transform_4, window_bounds = array<i64: 1, 256>}, {pipeline_mode = #tpu.pipeline_mode<synchronous>, transform_indices = @transform_5, window_bounds = array<i64: 256, 128>}, {pipeline_mode = #tpu.pipeline_mode<synchronous>, transform_indices = @transform_6, window_bounds = array<i64: 1, 128>}, {transform_indices = @transform_7, window_bounds = array<i64: 104, 128>}]} {
    %c0 = arith.constant 0 : index
    %c0_0 = arith.constant 0 : index
    %0 = vector.load %arg1[%c0, %c0_0] : memref<104x128xf32, #tpu.memory_space<vmem>>, vector<104x128xf32>
    %c0_1 = arith.constant 0 : index
    %c0_2 = arith.constant 0 : index
    %1 = vector.load %arg2[%c0_1, %c0_2] : memref<128x256xf32, #tpu.memory_space<vmem>>, vector<128x256xf32>
    %c0_3 = arith.constant 0 : index
    %c0_4 = arith.constant 0 : index
    %2 = vector.load %arg3[%c0_3, %c0_4] : memref<1x256xf32, #tpu.memory_space<vmem>>, vector<1x256xf32>
    %cst = arith.constant dense<0.000000e+00> : vector<104x256xf32>
    %3 = tpu.matmul %0, %1, %cst {dimension_numbers = #tpu.dot_dimension_numbers<[1], [0], [0], [1], [0, 0, 1, 1], [], []>} : vector<104x128xf32>, vector<128x256xf32>, vector<104x256xf32> -> vector<104x256xf32>
    %4 = vector.broadcast %2 : vector<1x256xf32> to vector<104x256xf32>
    %5 = arith.addf %3, %4 : vector<104x256xf32>
    %cst_5 = arith.constant 5.000000e-01 : f32
    %6 = vector.broadcast %cst_5 : f32 to vector<104x256xf32>
    %7 = arith.mulf %6, %5 : vector<104x256xf32>
    %cst_6 = arith.constant 0.707106769 : f32
    %8 = vector.broadcast %cst_6 : f32 to vector<104x256xf32>
    %9 = arith.mulf %5, %8 : vector<104x256xf32>
    %10 = math.erf %9 : vector<104x256xf32>
    %cst_7 = arith.constant 1.000000e+00 : f32
    %11 = vector.broadcast %cst_7 : f32 to vector<104x256xf32>
    %12 = arith.addf %11, %10 : vector<104x256xf32>
    %13 = arith.mulf %7, %12 : vector<104x256xf32>
    %c0_8 = arith.constant 0 : index
    %c0_9 = arith.constant 0 : index
    %14 = vector.load %arg4[%c0_8, %c0_9] : memref<256x256xf32, #tpu.memory_space<vmem>>, vector<256x256xf32>
    %c0_10 = arith.constant 0 : index
    %c0_11 = arith.constant 0 : index
    %15 = vector.load %arg5[%c0_10, %c0_11] : memref<1x256xf32, #tpu.memory_space<vmem>>, vector<1x256xf32>
    %cst_12 = arith.constant dense<0.000000e+00> : vector<104x256xf32>
    %16 = tpu.matmul %13, %14, %cst_12 {dimension_numbers = #tpu.dot_dimension_numbers<[1], [0], [0], [1], [0, 0, 1, 1], [], []>} : vector<104x256xf32>, vector<256x256xf32>, vector<104x256xf32> -> vector<104x256xf32>
    %17 = vector.broadcast %15 : vector<1x256xf32> to vector<104x256xf32>
    %18 = arith.addf %16, %17 : vector<104x256xf32>
    %cst_13 = arith.constant 5.000000e-01 : f32
    %19 = vector.broadcast %cst_13 : f32 to vector<104x256xf32>
    %20 = arith.mulf %19, %18 : vector<104x256xf32>
    %cst_14 = arith.constant 0.707106769 : f32
    %21 = vector.broadcast %cst_14 : f32 to vector<104x256xf32>
    %22 = arith.mulf %18, %21 : vector<104x256xf32>
    %23 = math.erf %22 : vector<104x256xf32>
    %cst_15 = arith.constant 1.000000e+00 : f32
    %24 = vector.broadcast %cst_15 : f32 to vector<104x256xf32>
    %25 = arith.addf %24, %23 : vector<104x256xf32>
    %26 = arith.mulf %20, %25 : vector<104x256xf32>
    %27 = arith.mulf %26, %26 : vector<104x256xf32>
    %cst_16 = arith.constant dense<0.000000e+00> : vector<104xf32>
    %28 = vector.multi_reduction <add>, %27, %cst_16 [1] : vector<104x256xf32> to vector<104xf32>
    %29 = vector.shape_cast %28 : vector<104xf32> to vector<104x1xf32>
    %30 = math.rsqrt %29 : vector<104x1xf32>
    %cst_17 = arith.constant 1.000000e+06 : f32
    %31 = vector.broadcast %cst_17 : f32 to vector<104x1xf32>
    %32 = arith.minimumf %30, %31 : vector<104x1xf32>
    %33 = vector.broadcast %32 : vector<104x1xf32> to vector<104x256xf32>
    %34 = arith.mulf %26, %33 : vector<104x256xf32>
    %c0_18 = arith.constant 0 : index
    %c0_19 = arith.constant 0 : index
    %35 = vector.load %arg6[%c0_18, %c0_19] : memref<256x128xf32, #tpu.memory_space<vmem>>, vector<256x128xf32>
    %c0_20 = arith.constant 0 : index
    %c0_21 = arith.constant 0 : index
    %36 = vector.load %arg7[%c0_20, %c0_21] : memref<1x128xf32, #tpu.memory_space<vmem>>, vector<1x128xf32>
    %cst_22 = arith.constant dense<0.000000e+00> : vector<104x128xf32>
    %37 = tpu.matmul %34, %35, %cst_22 {dimension_numbers = #tpu.dot_dimension_numbers<[1], [0], [0], [1], [0, 0, 1, 1], [], []>} : vector<104x256xf32>, vector<256x128xf32>, vector<104x128xf32> -> vector<104x128xf32>
    %38 = vector.broadcast %36 : vector<1x128xf32> to vector<104x128xf32>
    %39 = arith.addf %37, %38 : vector<104x128xf32>
    %c0_23 = arith.constant 0 : index
    %c0_24 = arith.constant 0 : index
    %40 = vector.load %arg8[%c0_23, %c0_24] : memref<104x128xf32, #tpu.memory_space<vmem>>, vector<104x128xf32>
    tpu.vector_store %arg8[%c0_23, %c0_24], %39 {strides = array<i32>} : memref<104x128xf32, #tpu.memory_space<vmem>>, vector<104x128xf32>,
    return
  }
  func.func @transform_0(%arg0: i32) -> (i32, i32) {
    %c0_i32 = arith.constant 0 : i32
    %c0_i32_0 = arith.constant 0 : i32
    return %arg0, %c0_i32 : i32, i32
  }
  func.func @transform_1(%arg0: i32) -> (i32, i32) {
    %c0_i32 = arith.constant 0 : i32
    %c0_i32_0 = arith.constant 0 : i32
    %c0_i32_1 = arith.constant 0 : i32
    return %c0_i32, %c0_i32_0 : i32, i32
  }
  func.func @transform_2(%arg0: i32) -> (i32, i32) {
    %c0_i32 = arith.constant 0 : i32
    %c0_i32_0 = arith.constant 0 : i32
    %c0_i32_1 = arith.constant 0 : i32
    return %c0_i32, %c0_i32_0 : i32, i32
  }
  func.func @transform_3(%arg0: i32) -> (i32, i32) {
    %c0_i32 = arith.constant 0 : i32
    %c0_i32_0 = arith.constant 0 : i32
    %c0_i32_1 = arith.constant 0 : i32
    return %c0_i32, %c0_i32_0 : i32, i32
  }
  func.func @transform_4(%arg0: i32) -> (i32, i32) {
    %c0_i32 = arith.constant 0 : i32
    %c0_i32_0 = arith.constant 0 : i32
    %c0_i32_1 = arith.constant 0 : i32
    return %c0_i32, %c0_i32_0 : i32, i32
  }
  func.func @transform_5(%arg0: i32) -> (i32, i32) {
    %c0_i32 = arith.constant 0 : i32
    %c0_i32_0 = arith.constant 0 : i32
    %c0_i32_1 = arith.constant 0 : i32
    return %c0_i32, %c0_i32_0 : i32, i32
  }
  func.func @transform_6(%arg0: i32) -> (i32, i32) {
    %c0_i32 = arith.constant 0 : i32
    %c0_i32_0 = arith.constant 0 : i32
    %c0_i32_1 = arith.constant 0 : i32
    return %c0_i32, %c0_i32_0 : i32, i32
  }
  func.func @transform_7(%arg0: i32) -> (i32, i32) {
    %c0_i32 = arith.constant 0 : i32
    %c0_i32_0 = arith.constant 0 : i32
    return %arg0, %c0_i32 : i32, i32
  }
}

</mosaic_0001>

<llo_original>
// kernel: tpu_custom_call.1
$region0: #{tpu_custom_call.1}
  #allocation0 [shape = 'u32[]', space=smem, size = 0x4, offset = 0x4, fixed_abs, tag = 'smem constant byte address 0x4 - core index']
  #allocation1 [shape = 'u32[144,128]{1,0:T(1,128)}', space=vmem, size = 0x12000, scoped, tag = 'internal scratch']
  %s0 = inlined_call_operand.hbm [shape: f32[208,128], index: 0, kind: input, shape index: {}]
  %s1 = inlined_call_operand.hbm [shape: f32[128,256], index: 1, kind: input, shape index: {}]
  %s2 = inlined_call_operand.vmem [shape: f32[1,256], index: 2, kind: input, shape index: {}]
  %s3 = inlined_call_operand.hbm [shape: f32[256,256], index: 3, kind: input, shape index: {}]
  %s4 = inlined_call_operand.vmem [shape: f32[1,256], index: 4, kind: input, shape index: {}]
  %s5 = inlined_call_operand.hbm [shape: f32[256,128], index: 5, kind: input, shape index: {}]
  %s6 = inlined_call_operand.vmem [shape: f32[1,128], index: 6, kind: input, shape index: {}]
  %s7 = inlined_call_operand.hbm [shape: f32[208,128], index: 7, kind: output, shape index: {}]
  %s8 = sld [smem:[#allocation0]]
  $region77: #{tpu_custom_call.1} parent=0
    _
  %s10 = ssub.s32 1, %s8
  %s11 = scalar_select 0, %s10, %s8
  $region1: #{tpu_custom_call.1} parent=0
    #allocation2 [shape = 'u8[106496]{0}', space=vmem, size = 0x1a000, scoped, tag = 'input window, operand 0']
    #allocation3 [shape = 's32[2]{0}', space=sflag, size = 0x8, scoped, tag = 'scoped memory for tpu_custom_call.1']
    #allocation4 [shape = 's32[2]{0}', space=sflag, size = 0x8, scoped, tag = 'scoped memory for tpu_custom_call.1']
    #allocation5 [shape = 'u8[131072]{0}', space=vmem, size = 0x20000, scoped, tag = 'input window, operand 1, single buffered']
    #allocation6 [shape = 's32[1]{0}', space=sflag, size = 0x4, scoped, tag = 'scoped memory for tpu_custom_call.1']
    #allocation7 [shape = 'u8[262144]{0}', space=vmem, size = 0x40000, scoped, tag = 'input window, operand 3, single buffered']
    #allocation8 [shape = 'u8[131072]{0}', space=vmem, size = 0x20000, scoped, tag = 'input window, operand 5, single buffered']
    #allocation9 [shape = 's32[1]{0}', space=sflag, size = 0x4, scoped, tag = 'scoped memory for tpu_custom_call.1']
    #allocation10 [shape = 'u8[106496]{0}', space=vmem, size = 0x1a000, scoped, tag = 'output window, operand 0']
    %12 = vsyncpa [#allocation3], 0
    %s13 = scalar_lea.sflag [#allocation3], 1
    %14 = vsyncpa %s13, 0
    %15 = vsyncpa [#allocation6], 0
    %16 = vsyncpa [#allocation9], 0
    %17 = vsyncpa [#allocation4], 0
    %s18 = scalar_lea.sflag [#allocation4], 1
    %19 = vsyncpa %s18, 0
    loop: start=0, step=1, limit=4
    $region2: #{tpu_custom_call.1} parent=1 // loop_pre_header
      _
    $region3: #{tpu_custom_call.1} parent=1 // loop_header
      %s21 = sphi 0, %s25
      %p22 = scmp.ge.s32.totalorder %s21, 4
      %s31 = sphi 0, %s33
      %s34 = sphi 0, %s31
      %s35 = sphi 0, %s34
      %s51 = sphi 0, %s35
      %s55 = sphi 0, %s55
      %s57 = sphi 0, %s55
      %s58 = sphi 0, %s57
      %s72 = sphi 0, %s58
      %s76 = sphi 0, %s76
      %s78 = sphi 0, %s76
      %s79 = sphi 0, %s78
      %s93 = sphi 0, %s79
      %s97 = sphi 0, %s97
      %s99 = sphi 0, %s97
      %s100 = sphi 0, %s99
      %s114 = sphi 0, %s100
      %s118 = sphi 0, %s118
      %s120 = sphi 0, %s118
      %s121 = sphi 0, %s120
      %s135 = sphi 0, %s121
      %s139 = sphi 0, %s139
      %s141 = sphi 0, %s139
      %s142 = sphi 0, %s141
      %s156 = sphi 0, %s142
      %s160 = sphi 0, %s160
      %s162 = sphi 0, %s160
      %s163 = sphi 0, %s162
      %s177 = sphi 0, %s163
      %s183 = sphi 0, %s185
      %s186 = sphi 0, %s183
      %s187 = sphi 0, %s186
      %s203 = sphi 0, %s187
    $region4: #{tpu_custom_call.1} parent=1 // loop_header_branch
      %24 = sbr.rel (%p22) target = $region8
    $region5: #{tpu_custom_call.1} parent=1 // loop_body
      %s26 = ssub.s32 %s21, 1
      %s27 = ssub.s32 %s21, 2
      %s28 = sadd.s32 %s21, 1
      %s29 = ssub.s32 %s21, %s28
      %p30 = scmp.eq.s32.totalorder %s29, 0
      %s32 = sadd.s32 %s31, 1
      %s33 = scalar_select %p30, %s31, %s32
      %p36 = pneg %p30
      %p37 = scmp.eq.s32.totalorder %s21, 1
      %p38 = por %p36, %p37
      %p39 = scmp.ne.s32.totalorder %s31, %s34
      %p40 = scmp.eq.s32.totalorder %s21, 0
      %p41 = por %p39, %p40
      %p42 = scmp.ne.s32.totalorder %s31, %s34
      %p43 = scmp.eq.s32.totalorder %s26, 1
      %p44 = por %p42, %p43
      %p45 = scmp.ne.s32.totalorder %s34, %s35
      %p46 = scmp.eq.s32.totalorder %s26, 0
      %p47 = por %p45, %p46
      %p48 = scmp.ne.s32.totalorder %s34, %s35
      %p49 = scmp.eq.s32.totalorder %s27, 1
      %p50 = por %p48, %p49
      %p52 = scmp.ne.s32.totalorder %s35, %s51
      %p53 = scmp.eq.s32.totalorder %s27, 0
      %p54 = por %p52, %p53
      %s56 = sadd.s32 %s55, 1
      %p59 = scmp.eq.s32.totalorder %s21, 1
      %p60 = scmp.ne.s32.totalorder %s55, %s57
      %p61 = scmp.eq.s32.totalorder %s21, 0
      %p62 = por %p60, %p61
      %p63 = scmp.ne.s32.totalorder %s55, %s57
      %p64 = scmp.eq.s32.totalorder %s26, 1
      %p65 = por %p63, %p64
      %p66 = scmp.ne.s32.totalorder %s57, %s58
      %p67 = scmp.eq.s32.totalorder %s26, 0
      %p68 = por %p66, %p67
      %p69 = scmp.ne.s32.totalorder %s57, %s58
      %p70 = scmp.eq.s32.totalorder %s27, 1
      %p71 = por %p69, %p70
      %p73 = scmp.ne.s32.totalorder %s58, %s72
      %p74 = scmp.eq.s32.totalorder %s27, 0
      %p75 = por %p73, %p74
      %s77 = sadd.s32 %s76, 1
      %p80 = scmp.eq.s32.totalorder %s21, 1
      %p81 = scmp.ne.s32.totalorder %s76, %s78
      %p82 = scmp.eq.s32.totalorder %s21, 0
      %p83 = por %p81, %p82
      %p84 = scmp.ne.s32.totalorder %s76, %s78
      %p85 = scmp.eq.s32.totalorder %s26, 1
      %p86 = por %p84, %p85
      %p87 = scmp.ne.s32.totalorder %s78, %s79
      %p88 = scmp.eq.s32.totalorder %s26, 0
      %p89 = por %p87, %p88
      %p90 = scmp.ne.s32.totalorder %s78, %s79
      %p91 = scmp.eq.s32.totalorder %s27, 1
      %p92 = por %p90, %p91
      %p94 = scmp.ne.s32.totalorder %s79, %s93
      %p95 = scmp.eq.s32.totalorder %s27, 0
      %p96 = por %p94, %p95
      %s98 = sadd.s32 %s97, 1
      %p101 = scmp.eq.s32.totalorder %s21, 1
      %p102 = scmp.ne.s32.totalorder %s97, %s99
      %p103 = scmp.eq.s32.totalorder %s21, 0
      %p104 = por %p102, %p103
      %p105 = scmp.ne.s32.totalorder %s97, %s99
      %p106 = scmp.eq.s32.totalorder %s26, 1
      %p107 = por %p105, %p106
      %p108 = scmp.ne.s32.totalorder %s99, %s100
      %p109 = scmp.eq.s32.totalorder %s26, 0
      %p110 = por %p108, %p109
      %p111 = scmp.ne.s32.totalorder %s99, %s100
      %p112 = scmp.eq.s32.totalorder %s27, 1
      %p113 = por %p111, %p112
      %p115 = scmp.ne.s32.totalorder %s100, %s114
      %p116 = scmp.eq.s32.totalorder %s27, 0
      %p117 = por %p115, %p116
      %s119 = sadd.s32 %s118, 1
      %p122 = scmp.eq.s32.totalorder %s21, 1
      %p123 = scmp.ne.s32.totalorder %s118, %s120
      %p124 = scmp.eq.s32.totalorder %s21, 0
      %p125 = por %p123, %p124
      %p126 = scmp.ne.s32.totalorder %s118, %s120
      %p127 = scmp.eq.s32.totalorder %s26, 1
      %p128 = por %p126, %p127
      %p129 = scmp.ne.s32.totalorder %s120, %s121
      %p130 = scmp.eq.s32.totalorder %s26, 0
      %p131 = por %p129, %p130
      %p132 = scmp.ne.s32.totalorder %s120, %s121
      %p133 = scmp.eq.s32.totalorder %s27, 1
      %p134 = por %p132, %p133
      %p136 = scmp.ne.s32.totalorder %s121, %s135
      %p137 = scmp.eq.s32.totalorder %s27, 0
      %p138 = por %p136, %p137
      %s140 = sadd.s32 %s139, 1
      %p143 = scmp.eq.s32.totalorder %s21, 1
      %p144 = scmp.ne.s32.totalorder %s139, %s141
      %p145 = scmp.eq.s32.totalorder %s21, 0
      %p146 = por %p144, %p145
      %p147 = scmp.ne.s32.totalorder %s139, %s141
      %p148 = scmp.eq.s32.totalorder %s26, 1
      %p149 = por %p147, %p148
      %p150 = scmp.ne.s32.totalorder %s141, %s142
      %p151 = scmp.eq.s32.totalorder %s26, 0
      %p152 = por %p150, %p151
      %p153 = scmp.ne.s32.totalorder %s141, %s142
      %p154 = scmp.eq.s32.totalorder %s27, 1
      %p155 = por %p153, %p154
      %p157 = scmp.ne.s32.totalorder %s142, %s156
      %p158 = scmp.eq.s32.totalorder %s27, 0
      %p159 = por %p157, %p158
      %s161 = sadd.s32 %s160, 1
      %p164 = scmp.eq.s32.totalorder %s21, 1
      %p165 = scmp.ne.s32.totalorder %s160, %s162
      %p166 = scmp.eq.s32.totalorder %s21, 0
      %p167 = por %p165, %p166
      %p168 = scmp.ne.s32.totalorder %s160, %s162
      %p169 = scmp.eq.s32.totalorder %s26, 1
      %p170 = por %p168, %p169
      %p171 = scmp.ne.s32.totalorder %s162, %s163
      %p172 = scmp.eq.s32.totalorder %s26, 0
      %p173 = por %p171, %p172
      %p174 = scmp.ne.s32.totalorder %s162, %s163
      %p175 = scmp.eq.s32.totalorder %s27, 1
      %p176 = por %p174, %p175
      %p178 = scmp.ne.s32.totalorder %s163, %s177
      %p179 = scmp.eq.s32.totalorder %s27, 0
      %p180 = por %p178, %p179
      %s181 = ssub.s32 %s21, %s28
      %p182 = scmp.eq.s32.totalorder %s181, 0
      %s184 = sadd.s32 %s183, 1
      %s185 = scalar_select %p182, %s183, %s184
      %p188 = pneg %p182
      %p189 = scmp.eq.s32.totalorder %s21, 1
      %p190 = por %p188, %p189
      %p191 = scmp.ne.s32.totalorder %s183, %s186
      %p192 = scmp.eq.s32.totalorder %s21, 0
      %p193 = por %p191, %p192
      %p194 = scmp.ne.s32.totalorder %s183, %s186
      %p195 = scmp.eq.s32.totalorder %s26, 1
      %p196 = por %p194, %p195
      %p197 = scmp.ne.s32.totalorder %s186, %s187
      %p198 = scmp.eq.s32.totalorder %s26, 0
      %p199 = por %p197, %p198
      %p200 = scmp.ne.s32.totalorder %s186, %s187
      %p201 = scmp.eq.s32.totalorder %s27, 1
      %p202 = por %p200, %p201
      %p204 = scmp.ne.s32.totalorder %s187, %s203
      %p205 = scmp.eq.s32.totalorder %s27, 0
      %p206 = por %p204, %p205
      %p207 = scmp.le.s32.totalorder 1, %s21
      %p208 = scmp.lt.s32.totalorder %s21, 3
      %p209 = pnand %p207, %p208
      %p210 = pneg %p209
      // Predicated region
      $region9: #{tpu_custom_call.1} parent=5 // pred_check
        _
      $region10: #{tpu_custom_call.1} parent=5 // pred_check_branch
        %212 = sbr.rel (%p209) target = $region12
      $region11: #{tpu_custom_call.1} parent=5 // pred_region
        %s213 = ssub.s32 %s21, 1
        // Predicated region
        $region13: #{tpu_custom_call.1} parent=11 // pred_check
          %p214 = pneg %p68
        $region14: #{tpu_custom_call.1} parent=11 // pred_check_branch
          %216 = sbr.rel (%p214) target = $region16
        $region15: #{tpu_custom_call.1} parent=11 // pred_region
          %s218 = ssub.s32 4096, 4096
          %219 = vsyncadd [#allocation6], %s218
          %s220 = sshll.u32 [#allocation5], 4
          %s221 = int_to_ptr.vmem [resolvable:$true] %s220
          %226 = dma.hbm_to_vmem [thread:$0]  %s1, 4096, %s221, [#allocation6], 256, 256, 16
        $region16: #{tpu_custom_call.1} parent=11 // pred_fallthru
          _
        // Predicated region
        $region17: #{tpu_custom_call.1} parent=11 // pred_check
          %p227 = pneg %p89
        $region18: #{tpu_custom_call.1} parent=11 // pred_check_branch
          %229 = sbr.rel (%p227) target = $region20
        $region19: #{tpu_custom_call.1} parent=11 // pred_region
          _
        $region20: #{tpu_custom_call.1} parent=11 // pred_fallthru
          _
        // Predicated region
        $region21: #{tpu_custom_call.1} parent=11 // pred_check
          %p230 = pneg %p110
        $region22: #{tpu_custom_call.1} parent=11 // pred_check_branch
          %232 = sbr.rel (%p230) target = $region24
        $region23: #{tpu_custom_call.1} parent=11 // pred_region
          %s234 = ssub.s32 8192, 8192
          %235 = vsyncadd [#allocation6], %s234
          %s236 = sshll.u32 [#allocation7], 4
          %s237 = int_to_ptr.vmem [resolvable:$true] %s236
          %242 = dma.hbm_to_vmem [thread:$0]  %s3, 8192, %s237, [#allocation6], 256, 256, 16
        $region24: #{tpu_custom_call.1} parent=11 // pred_fallthru
          _
        // Predicated region
        $region25: #{tpu_custom_call.1} parent=11 // pred_check
          %p243 = pneg %p131
        $region26: #{tpu_custom_call.1} parent=11 // pred_check_branch
          %245 = sbr.rel (%p243) target = $region28
        $region27: #{tpu_custom_call.1} parent=11 // pred_region
          _
        $region28: #{tpu_custom_call.1} parent=11 // pred_fallthru
          _
        // Predicated region
        $region29: #{tpu_custom_call.1} parent=11 // pred_check
          %p246 = pneg %p152
        $region30: #{tpu_custom_call.1} parent=11 // pred_check_branch
          %248 = sbr.rel (%p246) target = $region32
        $region31: #{tpu_custom_call.1} parent=11 // pred_region
          %s250 = ssub.s32 4096, 4096
          %251 = vsyncadd [#allocation9], %s250
          %s252 = sshll.u32 [#allocation8], 4
          %s253 = int_to_ptr.vmem [resolvable:$true] %s252
          %258 = dma.hbm_to_vmem [thread:$0]  %s5, 4096, %s253, [#allocation9], 128, 128, 8
        $region32: #{tpu_custom_call.1} parent=11 // pred_fallthru
          _
        // Predicated region
        $region33: #{tpu_custom_call.1} parent=11 // pred_check
          %p259 = pneg %p173
        $region34: #{tpu_custom_call.1} parent=11 // pred_check_branch
          %261 = sbr.rel (%p259) target = $region36
        $region35: #{tpu_custom_call.1} parent=11 // pred_region
          _
        $region36: #{tpu_custom_call.1} parent=11 // pred_fallthru
          _
      $region12: #{tpu_custom_call.1} parent=5 // pred_fallthru
        _
      %p262 = scmp.lt.s32.totalorder %s21, 2
      // Predicated region
      $region37: #{tpu_custom_call.1} parent=5 // pred_check
        %p263 = pneg %p262
      $region38: #{tpu_custom_call.1} parent=5 // pred_check_branch
        %265 = sbr.rel (%p263) target = $region40
      $region39: #{tpu_custom_call.1} parent=5 // pred_region
        // Predicated region
        $region41: #{tpu_custom_call.1} parent=39 // pred_check
          %p266 = pneg %p41
        $region42: #{tpu_custom_call.1} parent=39 // pred_check_branch
          %268 = sbr.rel (%p266) target = $region44
        $region43: #{tpu_custom_call.1} parent=39 // pred_region
          %s269 = sand.u32 %s31, 1
          %s270 = scalar_lea.sflag [#allocation3], %s269
          %s271 = sand.u32 %s31, 1
          %s272 = smul.addr %s271, 104
          %s273 = scalar_lea.vmem [#allocation2], %s272
          %s274 = smul.u32 13, %s21
          %s276 = ssub.s32 1664, 1664
          %277 = vsyncadd %s270, %s276
          %s278 = smul.addr %s274, 128
          %s279 = scalar_lea.hbm %s0, %s278
          %s280 = sshll.u32 %s273, 4
          %s281 = int_to_ptr.vmem [resolvable:$true] %s280
          %286 = dma.hbm_to_vmem [thread:$0]  %s279, 1664, %s281, %s270, 128, 128, 8
        $region44: #{tpu_custom_call.1} parent=39 // pred_fallthru
          _
      $region40: #{tpu_custom_call.1} parent=5 // pred_fallthru
        _
      %p287 = scmp.le.s32.totalorder 1, %s21
      %p288 = scmp.lt.s32.totalorder %s21, 3
      %p289 = pnand %p287, %p288
      %p290 = pneg %p289
      // Predicated region
      $region45: #{tpu_custom_call.1} parent=5 // pred_check
        _
      $region46: #{tpu_custom_call.1} parent=5 // pred_check_branch
        %292 = sbr.rel (%p289) target = $region48
      $region47: #{tpu_custom_call.1} parent=5 // pred_region
        %s293 = ssub.s32 %s21, 1
        %s294 = sand.u32 %s34, 1
        %s295 = scalar_lea.sflag [#allocation3], %s294
        %s296 = sand.u32 %s34, 1
        %s297 = smul.addr %s296, 104
        %s298 = scalar_lea.vmem [#allocation2], %s297
        // Predicated region
        $region49: #{tpu_custom_call.1} parent=47 // pred_check
          %p299 = pneg %p47
        $region50: #{tpu_custom_call.1} parent=47 // pred_check_branch
          %301 = sbr.rel (%p299) target = $region52
        $region51: #{tpu_custom_call.1} parent=47 // pred_region
          %302 = dma.done %s295, 1664
        $region52: #{tpu_custom_call.1} parent=47 // pred_fallthru
          _
        // Predicated region
        $region53: #{tpu_custom_call.1} parent=47 // pred_check
          %p303 = pneg %p68
        $region54: #{tpu_custom_call.1} parent=47 // pred_check_branch
          %305 = sbr.rel (%p303) target = $region56
        $region55: #{tpu_custom_call.1} parent=47 // pred_region
          %306 = dma.done [#allocation6], 4096
        $region56: #{tpu_custom_call.1} parent=47 // pred_fallthru
          _
        // Predicated region
        $region57: #{tpu_custom_call.1} parent=47 // pred_check
          %p307 = pneg %p110
        $region58: #{tpu_custom_call.1} parent=47 // pred_check_branch
          %309 = sbr.rel (%p307) target = $region60
        $region59: #{tpu_custom_call.1} parent=47 // pred_region
          %310 = dma.done [#allocation6], 8192
        $region60: #{tpu_custom_call.1} parent=47 // pred_fallthru
          _
        // Predicated region
        $region61: #{tpu_custom_call.1} parent=47 // pred_check
          %p311 = pneg %p152
        $region62: #{tpu_custom_call.1} parent=47 // pred_check_branch
          %313 = sbr.rel (%p311) target = $region64
        $region63: #{tpu_custom_call.1} parent=47 // pred_region
          %314 = dma.done [#allocation9], 4096
        $region64: #{tpu_custom_call.1} parent=47 // pred_fallthru
          _
        %s315 = sand.u32 %s34, 1
        %s316 = scalar_lea.sflag [#allocation3], %s315
        %s317 = sand.u32 %s34, 1
        %s318 = smul.addr %s317, 104
        %s319 = scalar_lea.vmem [#allocation2], %s318
        %p320 = pneg %p47
        %p321 = pneg %p44
        %p322 = pneg %p68
        %p323 = pneg %p65
        %p324 = pneg %p89
        %p325 = pneg %p86
        %p326 = pneg %p110
        %p327 = pneg %p107
        %p328 = pneg %p131
        %p329 = pneg %p128
        %p330 = pneg %p152
        %p331 = pneg %p149
        %p332 = pneg %p173
        %p333 = pneg %p170
        %p334 = pneg %p199
        %p335 = pneg %p196
        %s336 = sand.u32 %s186, 1
        %s337 = scalar_lea.sflag [#allocation4], %s336
        %s338 = sand.u32 %s186, 1
        %s339 = smul.addr %s338, 104
        %s340 = scalar_lea.vmem [#allocation10], %s339
        %s341 = smul.u32 13, %s26
        %s342 = smul.u32 13, %s26
        %v343 = vld [vmem:[%s298] sm:$0xff]
        %v344 = vld [vmem:[%s298 + $0x8] sm:$0xff]
        %v345 = vld [vmem:[%s298 + $0x10] sm:$0xff]
        %v346 = vld [vmem:[%s298 + $0x18] sm:$0xff]
        %v347 = vld [vmem:[%s298 + $0x20] sm:$0xff]
        %v348 = vld [vmem:[%s298 + $0x28] sm:$0xff]
        %v349 = vld [vmem:[%s298 + $0x30] sm:$0xff]
        %v350 = vld [vmem:[%s298 + $0x38] sm:$0xff]
        %v351 = vld [vmem:[%s298 + $0x40] sm:$0xff]
        %v352 = vld [vmem:[%s298 + $0x48] sm:$0xff]
        %v353 = vld [vmem:[%s298 + $0x50] sm:$0xff]
        %v354 = vld [vmem:[%s298 + $0x58] sm:$0xff]
        %v355 = vld [vmem:[%s298 + $0x60] sm:$0xff]
        %v356 = vld [vmem:[#allocation5] sm:$0xff]
        %v357 = vld [vmem:[#allocation5 + $0x8] sm:$0xff]
        %v358 = vld [vmem:[#allocation5 + $0x10] sm:$0xff]
        %v359 = vld [vmem:[#allocation5 + $0x18] sm:$0xff]
        %v360 = vld [vmem:[#allocation5 + $0x20] sm:$0xff]
        %v361 = vld [vmem:[#allocation5 + $0x28] sm:$0xff]
        %v362 = vld [vmem:[#allocation5 + $0x30] sm:$0xff]
        %v363 = vld [vmem:[#allocation5 + $0x38] sm:$0xff]
        %v364 = vld [vmem:[#allocation5 + $0x40] sm:$0xff]
        %v365 = vld [vmem:[#allocation5 + $0x48] sm:$0xff]
        %v366 = vld [vmem:[#allocation5 + $0x50] sm:$0xff]
        %v367 = vld [vmem:[#allocation5 + $0x58] sm:$0xff]
        %v368 = vld [vmem:[#allocation5 + $0x60] sm:$0xff]
        %v369 = vld [vmem:[#allocation5 + $0x68] sm:$0xff]
        %v370 = vld [vmem:[#allocation5 + $0x70] sm:$0xff]
        %v371 = vld [vmem:[#allocation5 + $0x78] sm:$0xff]
        %v372 = vld [vmem:[#allocation5 + $0x80] sm:$0xff]
        %v373 = vld [vmem:[#allocation5 + $0x88] sm:$0xff]
        %v374 = vld [vmem:[#allocation5 + $0x90] sm:$0xff]
        %v375 = vld [vmem:[#allocation5 + $0x98] sm:$0xff]
        %v376 = vld [vmem:[#allocation5 + $0xa0] sm:$0xff]
        %v377 = vld [vmem:[#allocation5 + $0xa8] sm:$0xff]
        %v378 = vld [vmem:[#allocation5 + $0xb0] sm:$0xff]
        %v379 = vld [vmem:[#allocation5 + $0xb8] sm:$0xff]
        %v380 = vld [vmem:[#allocation5 + $0xc0] sm:$0xff]
        %v381 = vld [vmem:[#allocation5 + $0xc8] sm:$0xff]
        %v382 = vld [vmem:[#allocation5 + $0xd0] sm:$0xff]
        %v383 = vld [vmem:[#allocation5 + $0xd8] sm:$0xff]
        %v384 = vld [vmem:[#allocation5 + $0xe0] sm:$0xff]
        %v385 = vld [vmem:[#allocation5 + $0xe8] sm:$0xff]
        %v386 = vld [vmem:[#allocation5 + $0xf0] sm:$0xff]
        %v387 = vld [vmem:[#allocation5 + $0xf8] sm:$0xff]
        %v388 = vld [vmem:[%s2] sm:$0x3]
        %v390 = vlaneseq
        %v391 = vshrl.u32 %v390, 7
        %v392 = vsub.s32 0, %v391
        %v393 = vrot.slane %v388, %v392
        %v394 = vlaneseq
        %v395 = vshrl.u32 %v394, 7
        %v396 = vsub.s32 1, %v395
        %v397 = vrot.slane %v388, %v396
        %400 = vmatprep.subr.mxu0 %v357
        %401 = vmatpush1.msra.mxu0 %v356
        %402 = vmatprep.subr.mxu0 %v359
        %403 = vmatpush1.msra.mxu0 %v358
        %404 = vmatprep.subr.mxu0 %v361
        %405 = vmatpush1.msra.mxu0 %v360
        %406 = vmatprep.subr.mxu0 %v363
        %407 = vmatpush1.msra.mxu0 %v362
        %408 = vmatprep.subr.mxu0 %v365
        %409 = vmatpush1.msra.mxu0 %v364
        %410 = vmatprep.subr.mxu0 %v367
        %411 = vmatpush1.msra.mxu0 %v366
        %412 = vmatprep.subr.mxu0 %v369
        %413 = vmatpush1.msra.mxu0 %v368
        %414 = vmatprep.subr.mxu0 %v371
        %415 = vmatpush1.msra.mxu0 %v370
        %416 = vmatprep.subr.mxu0 %v373
        %417 = vmatpush1.msra.mxu0 %v372
        %418 = vmatprep.subr.mxu0 %v375
        %419 = vmatpush1.msra.mxu0 %v374
        %420 = vmatprep.subr.mxu0 %v377
        %421 = vmatpush1.msra.mxu0 %v376
        %422 = vmatprep.subr.mxu0 %v379
        %423 = vmatpush1.msra.mxu0 %v378
        %424 = vmatprep.subr.mxu0 %v381
        %425 = vmatpush1.msra.mxu0 %v380
        %426 = vmatprep.subr.mxu0 %v383
        %427 = vmatpush1.msra.mxu0 %v382
        %428 = vmatprep.subr.mxu0 %v385
        %429 = vmatpush1.msra.mxu0 %v384
        %430 = vmatprep.subr.mxu0 %v387
        %431 = vmatpush1.msra.mxu0 %v386
        %432 = vmatprep.subr.mxu0 0.0
        %433 = vmatpush1.msra.mxu0 0.0
        %434 = vmatprep.subr.mxu0 0.0
        %435 = vmatpush1.msra.mxu0 0.0
        %436 = vmatprep.subr.mxu0 0.0
        %437 = vmatpush1.msra.mxu0 0.0
        %438 = vmatprep.subr.mxu0 0.0
        %439 = vmatpush1.msra.mxu0 0.0
        %440 = vmatprep.subr.mxu0 0.0
        %441 = vmatpush1.msra.mxu0 0.0
        %442 = vmatprep.subr.mxu0 0.0
        %443 = vmatpush1.msra.mxu0 0.0
        %444 = vmatprep.subr.mxu0 0.0
        %445 = vmatpush1.msra.mxu0 0.0
        %446 = vmatprep.subr.mxu0 0.0
        %447 = vmatpush1.msra.mxu0 0.0
        %448 = vmatprep.subr.mxu0 0.0
        %449 = vmatpush1.msra.mxu0 0.0
        %450 = vmatprep.subr.mxu0 0.0
        %451 = vmatpush1.msra.mxu0 0.0
        %452 = vmatprep.subr.mxu0 0.0
        %453 = vmatpush1.msra.mxu0 0.0
        %454 = vmatprep.subr.mxu0 0.0
        %455 = vmatpush1.msra.mxu0 0.0
        %456 = vmatprep.subr.mxu0 0.0
        %457 = vmatpush1.msra.mxu0 0.0
        %458 = vmatprep.subr.mxu0 0.0
        %459 = vmatpush1.msra.mxu0 0.0
        %460 = vmatprep.subr.mxu0 0.0
        %461 = vmatpush1.msra.mxu0 0.0
        %462 = vmatprep.subr.mxu0 0.0
        %463 = vmatpush1.msra.mxu0 0.0
        %464 = vmatprep.mubr.f32.mxu0 0.0
        %465 = vmatmul.mubr.f32.gmra.mrb[0].mxu0 %v343
        %v466 = vpop.f32.mrb[0].mxu0
        %v467 = vadd.f32 %v393, %v466
        %v468 = vpop.f32.mrb[0].mxu0
        %v469 = vadd.f32 %v397, %v468
        %470 = vmatprep.mubr.f32.mxu0 0.0
        %471 = vmatmul.mubr.f32.gmra.mrb[0].mxu0 %v344
        %v472 = vpop.f32.mrb[0].mxu0
        %v473 = vadd.f32 %v393, %v472
        %v474 = vpop.f32.mrb[0].mxu0
        %v475 = vadd.f32 %v397, %v474
        %476 = vmatprep.mubr.f32.mxu0 0.0
        %477 = vmatmul.mubr.f32.gmra.mrb[0].mxu0 %v345
        %v478 = vpop.f32.mrb[0].mxu0
        %v479 = vadd.f32 %v393, %v478
        %v480 = vpop.f32.mrb[0].mxu0
        %v481 = vadd.f32 %v397, %v480
        %482 = vmatprep.mubr.f32.mxu0 0.0
        %483 = vmatmul.mubr.f32.gmra.mrb[0].mxu0 %v346
        %v484 = vpop.f32.mrb[0].mxu0
        %v485 = vadd.f32 %v393, %v484
        %v486 = vpop.f32.mrb[0].mxu0
        %v487 = vadd.f32 %v397, %v486
        %488 = vmatprep.mubr.f32.mxu0 0.0
        %489 = vmatmul.mubr.f32.gmra.mrb[0].mxu0 %v347
        %v490 = vpop.f32.mrb[0].mxu0
        %v491 = vadd.f32 %v393, %v490
        %v492 = vpop.f32.mrb[0].mxu0
        %v493 = vadd.f32 %v397, %v492
        %494 = vmatprep.mubr.f32.mxu0 0.0
        %495 = vmatmul.mubr.f32.gmra.mrb[0].mxu0 %v348
        %v496 = vpop.f32.mrb[0].mxu0
        %v497 = vadd.f32 %v393, %v496
        %v498 = vpop.f32.mrb[0].mxu0
        %v499 = vadd.f32 %v397, %v498
        %500 = vmatprep.mubr.f32.mxu0 0.0
        %501 = vmatmul.mubr.f32.gmra.mrb[0].mxu0 %v349
        %v502 = vpop.f32.mrb[0].mxu0
        %v503 = vadd.f32 %v393, %v502
        %v504 = vpop.f32.mrb[0].mxu0
        %v505 = vadd.f32 %v397, %v504
        %506 = vmatprep.mubr.f32.mxu0 0.0
        %507 = vmatmul.mubr.f32.gmra.mrb[0].mxu0 %v350
        %v508 = vpop.f32.mrb[0].mxu0
        %v509 = vadd.f32 %v393, %v508
        %v510 = vpop.f32.mrb[0].mxu0
        %v511 = vadd.f32 %v397, %v510
        %512 = vmatprep.mubr.f32.mxu0 0.0
        %513 = vmatmul.mubr.f32.gmra.mrb[0].mxu0 %v351
        %v514 = vpop.f32.mrb[0].mxu0
        %v515 = vadd.f32 %v393, %v514
        %v516 = vpop.f32.mrb[0].mxu0
        %v517 = vadd.f32 %v397, %v516
        %518 = vmatprep.mubr.f32.mxu0 0.0
        %519 = vmatmul.mubr.f32.gmra.mrb[0].mxu0 %v352
        %v520 = vpop.f32.mrb[0].mxu0
        %v521 = vadd.f32 %v393, %v520
        %v522 = vpop.f32.mrb[0].mxu0
        %v523 = vadd.f32 %v397, %v522
        %524 = vmatprep.mubr.f32.mxu0 0.0
        %525 = vmatmul.mubr.f32.gmra.mrb[0].mxu0 %v353
        %v526 = vpop.f32.mrb[0].mxu0
        %v527 = vadd.f32 %v393, %v526
        %v528 = vpop.f32.mrb[0].mxu0
        %v529 = vadd.f32 %v397, %v528
        %530 = vmatprep.mubr.f32.mxu0 0.0
        %531 = vmatmul.mubr.f32.gmra.mrb[0].mxu0 %v354
        %v532 = vpop.f32.mrb[0].mxu0
        %v533 = vadd.f32 %v393, %v532
        %v534 = vpop.f32.mrb[0].mxu0
        %v535 = vadd.f32 %v397, %v534
        %536 = vmatprep.mubr.f32.mxu0 0.0
        %537 = vmatmul.mubr.f32.gmra.mrb[0].mxu0 %v355
        %v538 = vpop.f32.mrb[0].mxu0
        %v539 = vadd.f32 %v393, %v538
        %v540 = vpop.f32.mrb[0].mxu0
        %v541 = vadd.f32 %v397, %v540
        %542 = vdwg.mxu0
        %v543 = vmul.f32 %v467, 0.5
        %v544 = vmul.f32 %v469, 0.5
        %v545 = vmul.f32 %v473, 0.5
        %v546 = vmul.f32 %v475, 0.5
        %v547 = vmul.f32 %v479, 0.5
        %v548 = vmul.f32 %v481, 0.5
        %v549 = vmul.f32 %v485, 0.5
        %v550 = vmul.f32 %v487, 0.5
        %v551 = vmul.f32 %v491, 0.5
        %v552 = vmul.f32 %v493, 0.5
        %v553 = vmul.f32 %v497, 0.5
        %v554 = vmul.f32 %v499, 0.5
        %v555 = vmul.f32 %v503, 0.5
        %v556 = vmul.f32 %v505, 0.5
        %v557 = vmul.f32 %v509, 0.5
        %v558 = vmul.f32 %v511, 0.5
        %v559 = vmul.f32 %v515, 0.5
        %v560 = vmul.f32 %v517, 0.5
        %v561 = vmul.f32 %v521, 0.5
        %v562 = vmul.f32 %v523, 0.5
        %v563 = vmul.f32 %v527, 0.5
        %v564 = vmul.f32 %v529, 0.5
        %v565 = vmul.f32 %v533, 0.5
        %v566 = vmul.f32 %v535, 0.5
        %v567 = vmul.f32 %v539, 0.5
        %v568 = vmul.f32 %v541, 0.5
        %v569 = vmul.f32 %v467, 0.70710677
        %v570 = vmul.f32 %v469, 0.70710677
        %v571 = vmul.f32 %v473, 0.70710677
        %v572 = vmul.f32 %v475, 0.70710677
        %v573 = vmul.f32 %v479, 0.70710677
        %v574 = vmul.f32 %v481, 0.70710677
        %v575 = vmul.f32 %v485, 0.70710677
        %v576 = vmul.f32 %v487, 0.70710677
        %v577 = vmul.f32 %v491, 0.70710677
        %v578 = vmul.f32 %v493, 0.70710677
        %v579 = vmul.f32 %v497, 0.70710677
        %v580 = vmul.f32 %v499, 0.70710677
        %v581 = vmul.f32 %v503, 0.70710677
        %v582 = vmul.f32 %v505, 0.70710677
        %v583 = vmul.f32 %v509, 0.70710677
        %v584 = vmul.f32 %v511, 0.70710677
        %v585 = vmul.f32 %v515, 0.70710677
        %v586 = vmul.f32 %v517, 0.70710677
        %v587 = vmul.f32 %v521, 0.70710677
        %v588 = vmul.f32 %v523, 0.70710677
        %v589 = vmul.f32 %v527, 0.70710677
        %v590 = vmul.f32 %v529, 0.70710677
        %v591 = vmul.f32 %v533, 0.70710677
        %v592 = vmul.f32 %v535, 0.70710677
        %v593 = vmul.f32 %v539, 0.70710677
        %v594 = vmul.f32 %v541, 0.70710677
        %v595 = verf.f32.pop %v569
        %v596 = verf.f32.pop %v570
        %v597 = verf.f32.pop %v571
        %v598 = verf.f32.pop %v572
        %v599 = verf.f32.pop %v573
        %v600 = verf.f32.pop %v574
        %v601 = verf.f32.pop %v575
        %v602 = verf.f32.pop %v576
        %v603 = verf.f32.pop %v577
        %v604 = verf.f32.pop %v578
        %v605 = verf.f32.pop %v579
        %v606 = verf.f32.pop %v580
        %v607 = verf.f32.pop %v581
        %v608 = verf.f32.pop %v582
        %v609 = verf.f32.pop %v583
        %v610 = verf.f32.pop %v584
        %v611 = verf.f32.pop %v585
        %v612 = verf.f32.pop %v586
        %v613 = verf.f32.pop %v587
        %v614 = verf.f32.pop %v588
        %v615 = verf.f32.pop %v589
        %v616 = verf.f32.pop %v590
        %v617 = verf.f32.pop %v591
        %v618 = verf.f32.pop %v592
        %v619 = verf.f32.pop %v593
        %v620 = verf.f32.pop %v594
        %v621 = vadd.f32 %v595, 1.0
        %v622 = vadd.f32 %v596, 1.0
        %v623 = vadd.f32 %v597, 1.0
        %v624 = vadd.f32 %v598, 1.0
        %v625 = vadd.f32 %v599, 1.0
        %v626 = vadd.f32 %v600, 1.0
        %v627 = vadd.f32 %v601, 1.0
        %v628 = vadd.f32 %v602, 1.0
        %v629 = vadd.f32 %v603, 1.0
        %v630 = vadd.f32 %v604, 1.0
        %v631 = vadd.f32 %v605, 1.0
        %v632 = vadd.f32 %v606, 1.0
        %v633 = vadd.f32 %v607, 1.0
        %v634 = vadd.f32 %v608, 1.0
        %v635 = vadd.f32 %v609, 1.0
        %v636 = vadd.f32 %v610, 1.0
        %v637 = vadd.f32 %v611, 1.0
        %v638 = vadd.f32 %v612, 1.0
        %v639 = vadd.f32 %v613, 1.0
        %v640 = vadd.f32 %v614, 1.0
        %v641 = vadd.f32 %v615, 1.0
        %v642 = vadd.f32 %v616, 1.0
        %v643 = vadd.f32 %v617, 1.0
        %v644 = vadd.f32 %v618, 1.0
        %v645 = vadd.f32 %v619, 1.0
        %v646 = vadd.f32 %v620, 1.0
        %v647 = vmul.f32 %v543, %v621
        %v648 = vmul.f32 %v544, %v622
        %v649 = vmul.f32 %v545, %v623
        %v650 = vmul.f32 %v546, %v624
        %v651 = vmul.f32 %v547, %v625
        %v652 = vmul.f32 %v548, %v626
        %v653 = vmul.f32 %v549, %v627
        %v654 = vmul.f32 %v550, %v628
        %v655 = vmul.f32 %v551, %v629
        %v656 = vmul.f32 %v552, %v630
        %v657 = vmul.f32 %v553, %v631
        %v658 = vmul.f32 %v554, %v632
        %v659 = vmul.f32 %v555, %v633
        %v660 = vmul.f32 %v556, %v634
        %v661 = vmul.f32 %v557, %v635
        %v662 = vmul.f32 %v558, %v636
        %v663 = vmul.f32 %v559, %v637
        %v664 = vmul.f32 %v560, %v638
        %v665 = vmul.f32 %v561, %v639
        %v666 = vmul.f32 %v562, %v640
        %v667 = vmul.f32 %v563, %v641
        %v668 = vmul.f32 %v564, %v642
        %v669 = vmul.f32 %v565, %v643
        %v670 = vmul.f32 %v566, %v644
        %v671 = vmul.f32 %v567, %v645
        %v672 = vmul.f32 %v568, %v646
        %v673 = vld [vmem:[#allocation7] sm:$0xff]
        %v674 = vld [vmem:[#allocation7 + $0x8] sm:$0xff]
        %v675 = vld [vmem:[#allocation7 + $0x10] sm:$0xff]
        %v676 = vld [vmem:[#allocation7 + $0x18] sm:$0xff]
        %v677 = vld [vmem:[#allocation7 + $0x20] sm:$0xff]
        %v678 = vld [vmem:[#allocation7 + $0x28] sm:$0xff]
        %v679 = vld [vmem:[#allocation7 + $0x30] sm:$0xff]
        %v680 = vld [vmem:[#allocation7 + $0x38] sm:$0xff]
        %v681 = vld [vmem:[#allocation7 + $0x40] sm:$0xff]
        %v682 = vld [vmem:[#allocation7 + $0x48] sm:$0xff]
        %v683 = vld [vmem:[#allocation7 + $0x50] sm:$0xff]
        %v684 = vld [vmem:[#allocation7 + $0x58] sm:$0xff]
        %v685 = vld [vmem:[#allocation7 + $0x60] sm:$0xff]
        %v686 = vld [vmem:[#allocation7 + $0x68] sm:$0xff]
        %v687 = vld [vmem:[#allocation7 + $0x70] sm:$0xff]
        %v688 = vld [vmem:[#allocation7 + $0x78] sm:$0xff]
        %v689 = vld [vmem:[#allocation7 + $0x80] sm:$0xff]
        %v690 = vld [vmem:[#allocation7 + $0x88] sm:$0xff]
        %v691 = vld [vmem:[#allocation7 + $0x90] sm:$0xff]
        %v692 = vld [vmem:[#allocation7 + $0x98] sm:$0xff]
        %v693 = vld [vmem:[#allocation7 + $0xa0] sm:$0xff]
        %v694 = vld [vmem:[#allocation7 + $0xa8] sm:$0xff]
        %v695 = vld [vmem:[#allocation7 + $0xb0] sm:$0xff]
        %v696 = vld [vmem:[#allocation7 + $0xb8] sm:$0xff]
        %v697 = vld [vmem:[#allocation7 + $0xc0] sm:$0xff]
        %v698 = vld [vmem:[#allocation7 + $0xc8] sm:$0xff]
        %v699 = vld [vmem:[#allocation7 + $0xd0] sm:$0xff]
        %v700 = vld [vmem:[#allocation7 + $0xd8] sm:$0xff]
        %v701 = vld [vmem:[#allocation7 + $0xe0] sm:$0xff]
        %v702 = vld [vmem:[#allocation7 + $0xe8] sm:$0xff]
        %v703 = vld [vmem:[#allocation7 + $0xf0] sm:$0xff]
        %v704 = vld [vmem:[#allocation7 + $0xf8] sm:$0xff]
        %v705 = vld [vmem:[#allocation7 + $0x100] sm:$0xff]
        %v706 = vld [vmem:[#allocation7 + $0x108] sm:$0xff]
        %v707 = vld [vmem:[#allocation7 + $0x110] sm:$0xff]
        %v708 = vld [vmem:[#allocation7 + $0x118] sm:$0xff]
        %v709 = vld [vmem:[#allocation7 + $0x120] sm:$0xff]
        %v710 = vld [vmem:[#allocation7 + $0x128] sm:$0xff]
        %v711 = vld [vmem:[#allocation7 + $0x130] sm:$0xff]
        %v712 = vld [vmem:[#allocation7 + $0x138] sm:$0xff]
        %v713 = vld [vmem:[#allocation7 + $0x140] sm:$0xff]
        %v714 = vld [vmem:[#allocation7 + $0x148] sm:$0xff]
        %v715 = vld [vmem:[#allocation7 + $0x150] sm:$0xff]
        %v716 = vld [vmem:[#allocation7 + $0x158] sm:$0xff]
        %v717 = vld [vmem:[#allocation7 + $0x160] sm:$0xff]
        %v718 = vld [vmem:[#allocation7 + $0x168] sm:$0xff]
        %v719 = vld [vmem:[#allocation7 + $0x170] sm:$0xff]
        %v720 = vld [vmem:[#allocation7 + $0x178] sm:$0xff]
        %v721 = vld [vmem:[#allocation7 + $0x180] sm:$0xff]
        %v722 = vld [vmem:[#allocation7 + $0x188] sm:$0xff]
        %v723 = vld [vmem:[#allocation7 + $0x190] sm:$0xff]
        %v724 = vld [vmem:[#allocation7 + $0x198] sm:$0xff]
        %v725 = vld [vmem:[#allocation7 + $0x1a0] sm:$0xff]
        %v726 = vld [vmem:[#allocation7 + $0x1a8] sm:$0xff]
        %v727 = vld [vmem:[#allocation7 + $0x1b0] sm:$0xff]
        %v728 = vld [vmem:[#allocation7 + $0x1b8] sm:$0xff]
        %v729 = vld [vmem:[#allocation7 + $0x1c0] sm:$0xff]
        %v730 = vld [vmem:[#allocation7 + $0x1c8] sm:$0xff]
        %v731 = vld [vmem:[#allocation7 + $0x1d0] sm:$0xff]
        %v732 = vld [vmem:[#allocation7 + $0x1d8] sm:$0xff]
        %v733 = vld [vmem:[#allocation7 + $0x1e0] sm:$0xff]
        %v734 = vld [vmem:[#allocation7 + $0x1e8] sm:$0xff]
        %v735 = vld [vmem:[#allocation7 + $0x1f0] sm:$0xff]
        %v736 = vld [vmem:[#allocation7 + $0x1f8] sm:$0xff]
        %v737 = vld [vmem:[%s4] sm:$0x3]
        %v739 = vlaneseq
        %v740 = vshrl.u32 %v739, 7
        %v741 = vsub.s32 0, %v740
        %v742 = vrot.slane %v737, %v741
        %v743 = vlaneseq
        %v744 = vshrl.u32 %v743, 7
        %v745 = vsub.s32 1, %v744
        %v746 = vrot.slane %v737, %v745
        %749 = vmatprep.subr.mxu0 %v674
        %750 = vmatpush1.msra.mxu0 %v673
        %751 = vmatprep.subr.mxu0 %v676
        %752 = vmatpush1.msra.mxu0 %v675
        %753 = vmatprep.subr.mxu0 %v678
        %754 = vmatpush1.msra.mxu0 %v677
        %755 = vmatprep.subr.mxu0 %v680
        %756 = vmatpush1.msra.mxu0 %v679
        %757 = vmatprep.subr.mxu0 %v682
        %758 = vmatpush1.msra.mxu0 %v681
        %759 = vmatprep.subr.mxu0 %v684
        %760 = vmatpush1.msra.mxu0 %v683
        %761 = vmatprep.subr.mxu0 %v686
        %762 = vmatpush1.msra.mxu0 %v685
        %763 = vmatprep.subr.mxu0 %v688
        %764 = vmatpush1.msra.mxu0 %v687
        %765 = vmatprep.subr.mxu0 %v690
        %766 = vmatpush1.msra.mxu0 %v689
        %767 = vmatprep.subr.mxu0 %v692
        %768 = vmatpush1.msra.mxu0 %v691
        %769 = vmatprep.subr.mxu0 %v694
        %770 = vmatpush1.msra.mxu0 %v693
        %771 = vmatprep.subr.mxu0 %v696
        %772 = vmatpush1.msra.mxu0 %v695
        %773 = vmatprep.subr.mxu0 %v698
        %774 = vmatpush1.msra.mxu0 %v697
        %775 = vmatprep.subr.mxu0 %v700
        %776 = vmatpush1.msra.mxu0 %v699
        %777 = vmatprep.subr.mxu0 %v702
        %778 = vmatpush1.msra.mxu0 %v701
        %779 = vmatprep.subr.mxu0 %v704
        %780 = vmatpush1.msra.mxu0 %v703
        %781 = vmatprep.subr.mxu0 %v706
        %782 = vmatpush1.msra.mxu0 %v705
        %783 = vmatprep.subr.mxu0 %v708
        %784 = vmatpush1.msra.mxu0 %v707
        %785 = vmatprep.subr.mxu0 %v710
        %786 = vmatpush1.msra.mxu0 %v709
        %787 = vmatprep.subr.mxu0 %v712
        %788 = vmatpush1.msra.mxu0 %v711
        %789 = vmatprep.subr.mxu0 %v714
        %790 = vmatpush1.msra.mxu0 %v713
        %791 = vmatprep.subr.mxu0 %v716
        %792 = vmatpush1.msra.mxu0 %v715
        %793 = vmatprep.subr.mxu0 %v718
        %794 = vmatpush1.msra.mxu0 %v717
        %795 = vmatprep.subr.mxu0 %v720
        %796 = vmatpush1.msra.mxu0 %v719
        %797 = vmatprep.subr.mxu0 %v722
        %798 = vmatpush1.msra.mxu0 %v721
        %799 = vmatprep.subr.mxu0 %v724
        %800 = vmatpush1.msra.mxu0 %v723
        %801 = vmatprep.subr.mxu0 %v726
        %802 = vmatpush1.msra.mxu0 %v725
        %803 = vmatprep.subr.mxu0 %v728
        %804 = vmatpush1.msra.mxu0 %v727
        %805 = vmatprep.subr.mxu0 %v730
        %806 = vmatpush1.msra.mxu0 %v729
        %807 = vmatprep.subr.mxu0 %v732
        %808 = vmatpush1.msra.mxu0 %v731
        %809 = vmatprep.subr.mxu0 %v734
        %810 = vmatpush1.msra.mxu0 %v733
        %811 = vmatprep.subr.mxu0 %v736
        %812 = vmatpush1.msra.mxu0 %v735
        %813 = vmatprep.mubr.f32.mxu0 %v648
        %814 = vmatmul.mubr.f32.gmra.mrb[0].mxu0 %v647
        %v815 = vpop.f32.mrb[0].mxu0
        %v816 = vadd.f32 %v742, %v815
        %v817 = vpop.f32.mrb[0].mxu0
        %v818 = vadd.f32 %v746, %v817
        %819 = vmatprep.mubr.f32.mxu0 %v650
        %820 = vmatmul.mubr.f32.gmra.mrb[0].mxu0 %v649
        %v821 = vpop.f32.mrb[0].mxu0
        %v822 = vadd.f32 %v742, %v821
        %v823 = vpop.f32.mrb[0].mxu0
        %v824 = vadd.f32 %v746, %v823
        %825 = vmatprep.mubr.f32.mxu0 %v652
        %826 = vmatmul.mubr.f32.gmra.mrb[0].mxu0 %v651
        %v827 = vpop.f32.mrb[0].mxu0
        %v828 = vadd.f32 %v742, %v827
        %v829 = vpop.f32.mrb[0].mxu0
        %v830 = vadd.f32 %v746, %v829
        %831 = vmatprep.mubr.f32.mxu0 %v654
        %832 = vmatmul.mubr.f32.gmra.mrb[0].mxu0 %v653
        %v833 = vpop.f32.mrb[0].mxu0
        %v834 = vadd.f32 %v742, %v833
        %v835 = vpop.f32.mrb[0].mxu0
        %v836 = vadd.f32 %v746, %v835
        %837 = vmatprep.mubr.f32.mxu0 %v656
        %838 = vmatmul.mubr.f32.gmra.mrb[0].mxu0 %v655
        %v839 = vpop.f32.mrb[0].mxu0
        %v840 = vadd.f32 %v742, %v839
        %v841 = vpop.f32.mrb[0].mxu0
        %v842 = vadd.f32 %v746, %v841
        %843 = vmatprep.mubr.f32.mxu0 %v658
        %844 = vmatmul.mubr.f32.gmra.mrb[0].mxu0 %v657
        %v845 = vpop.f32.mrb[0].mxu0
        %v846 = vadd.f32 %v742, %v845
        %v847 = vpop.f32.mrb[0].mxu0
        %v848 = vadd.f32 %v746, %v847
        %849 = vmatprep.mubr.f32.mxu0 %v660
        %850 = vmatmul.mubr.f32.gmra.mrb[0].mxu0 %v659
        %v851 = vpop.f32.mrb[0].mxu0
        %v852 = vadd.f32 %v742, %v851
        %v853 = vpop.f32.mrb[0].mxu0
        %v854 = vadd.f32 %v746, %v853
        %855 = vmatprep.mubr.f32.mxu0 %v662
        %856 = vmatmul.mubr.f32.gmra.mrb[0].mxu0 %v661
        %v857 = vpop.f32.mrb[0].mxu0
        %v858 = vadd.f32 %v742, %v857
        %v859 = vpop.f32.mrb[0].mxu0
        %v860 = vadd.f32 %v746, %v859
        %861 = vmatprep.mubr.f32.mxu0 %v664
        %862 = vmatmul.mubr.f32.gmra.mrb[0].mxu0 %v663
        %v863 = vpop.f32.mrb[0].mxu0
        %v864 = vadd.f32 %v742, %v863
        %v865 = vpop.f32.mrb[0].mxu0
        %v866 = vadd.f32 %v746, %v865
        %867 = vmatprep.mubr.f32.mxu0 %v666
        %868 = vmatmul.mubr.f32.gmra.mrb[0].mxu0 %v665
        %v869 = vpop.f32.mrb[0].mxu0
        %v870 = vadd.f32 %v742, %v869
        %v871 = vpop.f32.mrb[0].mxu0
        %v872 = vadd.f32 %v746, %v871
        %873 = vmatprep.mubr.f32.mxu0 %v668
        %874 = vmatmul.mubr.f32.gmra.mrb[0].mxu0 %v667
        %v875 = vpop.f32.mrb[0].mxu0
        %v876 = vadd.f32 %v742, %v875
        %v877 = vpop.f32.mrb[0].mxu0
        %v878 = vadd.f32 %v746, %v877
        %879 = vmatprep.mubr.f32.mxu0 %v670
        %880 = vmatmul.mubr.f32.gmra.mrb[0].mxu0 %v669
        %v881 = vpop.f32.mrb[0].mxu0
        %v882 = vadd.f32 %v742, %v881
        %v883 = vpop.f32.mrb[0].mxu0
        %v884 = vadd.f32 %v746, %v883
        %885 = vmatprep.mubr.f32.mxu0 %v672
        %886 = vmatmul.mubr.f32.gmra.mrb[0].mxu0 %v671
        %v887 = vpop.f32.mrb[0].mxu0
        %v888 = vadd.f32 %v742, %v887
        %v889 = vpop.f32.mrb[0].mxu0
        %v890 = vadd.f32 %v746, %v889
        %891 = vdwg.mxu0
        %v892 = vmul.f32 %v816, 0.5
        %v893 = vmul.f32 %v818, 0.5
        %v894 = vmul.f32 %v822, 0.5
        %v895 = vmul.f32 %v824, 0.5
        %v896 = vmul.f32 %v828, 0.5
        %v897 = vmul.f32 %v830, 0.5
        %v898 = vmul.f32 %v834, 0.5
        %v899 = vmul.f32 %v836, 0.5
        %v900 = vmul.f32 %v840, 0.5
        %v901 = vmul.f32 %v842, 0.5
        %v902 = vmul.f32 %v846, 0.5
        %v903 = vmul.f32 %v848, 0.5
        %v904 = vmul.f32 %v852, 0.5
        %v905 = vmul.f32 %v854, 0.5
        %v906 = vmul.f32 %v858, 0.5
        %v907 = vmul.f32 %v860, 0.5
        %v908 = vmul.f32 %v864, 0.5
        %v909 = vmul.f32 %v866, 0.5
        %v910 = vmul.f32 %v870, 0.5
        %v911 = vmul.f32 %v872, 0.5
        %v912 = vmul.f32 %v876, 0.5
        %v913 = vmul.f32 %v878, 0.5
        %v914 = vmul.f32 %v882, 0.5
        %v915 = vmul.f32 %v884, 0.5
        %v916 = vmul.f32 %v888, 0.5
        %v917 = vmul.f32 %v890, 0.5
        %v918 = vmul.f32 %v816, 0.70710677
        %v919 = vmul.f32 %v818, 0.70710677
        %v920 = vmul.f32 %v822, 0.70710677
        %v921 = vmul.f32 %v824, 0.70710677
        %v922 = vmul.f32 %v828, 0.70710677
        %v923 = vmul.f32 %v830, 0.70710677
        %v924 = vmul.f32 %v834, 0.70710677
        %v925 = vmul.f32 %v836, 0.70710677
        %v926 = vmul.f32 %v840, 0.70710677
        %v927 = vmul.f32 %v842, 0.70710677
        %v928 = vmul.f32 %v846, 0.70710677
        %v929 = vmul.f32 %v848, 0.70710677
        %v930 = vmul.f32 %v852, 0.70710677
        %v931 = vmul.f32 %v854, 0.70710677
        %v932 = vmul.f32 %v858, 0.70710677
        %v933 = vmul.f32 %v860, 0.70710677
        %v934 = vmul.f32 %v864, 0.70710677
        %v935 = vmul.f32 %v866, 0.70710677
        %v936 = vmul.f32 %v870, 0.70710677
        %v937 = vmul.f32 %v872, 0.70710677
        %v938 = vmul.f32 %v876, 0.70710677
        %v939 = vmul.f32 %v878, 0.70710677
        %v940 = vmul.f32 %v882, 0.70710677
        %v941 = vmul.f32 %v884, 0.70710677
        %v942 = vmul.f32 %v888, 0.70710677
        %v943 = vmul.f32 %v890, 0.70710677
        %v944 = verf.f32.pop %v918
        %v945 = verf.f32.pop %v919
        %v946 = verf.f32.pop %v920
        %v947 = verf.f32.pop %v921
        %v948 = verf.f32.pop %v922
        %v949 = verf.f32.pop %v923
        %v950 = verf.f32.pop %v924
        %v951 = verf.f32.pop %v925
        %v952 = verf.f32.pop %v926
        %v953 = verf.f32.pop %v927
        %v954 = verf.f32.pop %v928
        %v955 = verf.f32.pop %v929
        %v956 = verf.f32.pop %v930
        %v957 = verf.f32.pop %v931
        %v958 = verf.f32.pop %v932
        %v959 = verf.f32.pop %v933
        %v960 = verf.f32.pop %v934
        %v961 = verf.f32.pop %v935
        %v962 = verf.f32.pop %v936
        %v963 = verf.f32.pop %v937
        %v964 = verf.f32.pop %v938
        %v965 = verf.f32.pop %v939
        %v966 = verf.f32.pop %v940
        %v967 = verf.f32.pop %v941
        %v968 = verf.f32.pop %v942
        %v969 = verf.f32.pop %v943
        %v970 = vadd.f32 %v944, 1.0
        %v971 = vadd.f32 %v945, 1.0
        %v972 = vadd.f32 %v946, 1.0
        %v973 = vadd.f32 %v947, 1.0
        %v974 = vadd.f32 %v948, 1.0
        %v975 = vadd.f32 %v949, 1.0
        %v976 = vadd.f32 %v950, 1.0
        %v977 = vadd.f32 %v951, 1.0
        %v978 = vadd.f32 %v952, 1.0
        %v979 = vadd.f32 %v953, 1.0
        %v980 = vadd.f32 %v954, 1.0
        %v981 = vadd.f32 %v955, 1.0
        %v982 = vadd.f32 %v956, 1.0
        %v983 = vadd.f32 %v957, 1.0
        %v984 = vadd.f32 %v958, 1.0
        %v985 = vadd.f32 %v959, 1.0
        %v986 = vadd.f32 %v960, 1.0
        %v987 = vadd.f32 %v961, 1.0
        %v988 = vadd.f32 %v962, 1.0
        %v989 = vadd.f32 %v963, 1.0
        %v990 = vadd.f32 %v964, 1.0
        %v991 = vadd.f32 %v965, 1.0
        %v992 = vadd.f32 %v966, 1.0
        %v993 = vadd.f32 %v967, 1.0
        %v994 = vadd.f32 %v968, 1.0
        %v995 = vadd.f32 %v969, 1.0
        %v996 = vmul.f32 %v892, %v970
        %v997 = vmul.f32 %v893, %v971
        %v998 = vmul.f32 %v894, %v972
        %v999 = vmul.f32 %v895, %v973
        %v1000 = vmul.f32 %v896, %v974
        %v1001 = vmul.f32 %v897, %v975
        %v1002 = vmul.f32 %v898, %v976
        %v1003 = vmul.f32 %v899, %v977
        %v1004 = vmul.f32 %v900, %v978
        %v1005 = vmul.f32 %v901, %v979
        %v1006 = vmul.f32 %v902, %v980
        %v1007 = vmul.f32 %v903, %v981
        %v1008 = vmul.f32 %v904, %v982
        %v1009 = vmul.f32 %v905, %v983
        %v1010 = vmul.f32 %v906, %v984
        %v1011 = vmul.f32 %v907, %v985
        %v1012 = vmul.f32 %v908, %v986
        %v1013 = vmul.f32 %v909, %v987
        %v1014 = vmul.f32 %v910, %v988
        %v1015 = vmul.f32 %v911, %v989
        %v1016 = vmul.f32 %v912, %v990
        %v1017 = vmul.f32 %v913, %v991
        %v1018 = vmul.f32 %v914, %v992
        %v1019 = vmul.f32 %v915, %v993
        %v1020 = vmul.f32 %v916, %v994
        %v1021 = vmul.f32 %v917, %v995
        %v1022 = vmul.f32 %v996, %v996
        %v1023 = vmul.f32 %v997, %v997
        %v1024 = vmul.f32 %v998, %v998
        %v1025 = vmul.f32 %v999, %v999
        %v1026 = vmul.f32 %v1000, %v1000
        %v1027 = vmul.f32 %v1001, %v1001
        %v1028 = vmul.f32 %v1002, %v1002
        %v1029 = vmul.f32 %v1003, %v1003
        %v1030 = vmul.f32 %v1004, %v1004
        %v1031 = vmul.f32 %v1005, %v1005
        %v1032 = vmul.f32 %v1006, %v1006
        %v1033 = vmul.f32 %v1007, %v1007
        %v1034 = vmul.f32 %v1008, %v1008
        %v1035 = vmul.f32 %v1009, %v1009
        %v1036 = vmul.f32 %v1010, %v1010
        %v1037 = vmul.f32 %v1011, %v1011
        %v1038 = vmul.f32 %v1012, %v1012
        %v1039 = vmul.f32 %v1013, %v1013
        %v1040 = vmul.f32 %v1014, %v1014
        %v1041 = vmul.f32 %v1015, %v1015
        %v1042 = vmul.f32 %v1016, %v1016
        %v1043 = vmul.f32 %v1017, %v1017
        %v1044 = vmul.f32 %v1018, %v1018
        %v1045 = vmul.f32 %v1019, %v1019
        %v1046 = vmul.f32 %v1020, %v1020
        %v1047 = vmul.f32 %v1021, %v1021
        %v1048 = vadd.f32 %v1022, %v1023
        %1049 = vadd.xlane.f32.xlu0 %v1048
        %v1050 = vpop.xlane.xlu0 %1049
        %v1051 = vadd.f32 %v1024, %v1025
        %1052 = vadd.xlane.f32.xlu0 %v1051
        %v1053 = vpop.xlane.xlu0 %1052
        %v1054 = vadd.f32 %v1026, %v1027
        %1055 = vadd.xlane.f32.xlu0 %v1054
        %v1056 = vpop.xlane.xlu0 %1055
        %v1057 = vadd.f32 %v1028, %v1029
        %1058 = vadd.xlane.f32.xlu0 %v1057
        %v1059 = vpop.xlane.xlu0 %1058
        %v1060 = vadd.f32 %v1030, %v1031
        %1061 = vadd.xlane.f32.xlu0 %v1060
        %v1062 = vpop.xlane.xlu0 %1061
        %v1063 = vadd.f32 %v1032, %v1033
        %1064 = vadd.xlane.f32.xlu0 %v1063
        %v1065 = vpop.xlane.xlu0 %1064
        %v1066 = vadd.f32 %v1034, %v1035
        %1067 = vadd.xlane.f32.xlu0 %v1066
        %v1068 = vpop.xlane.xlu0 %1067
        %v1069 = vadd.f32 %v1036, %v1037
        %1070 = vadd.xlane.f32.xlu0 %v1069
        %v1071 = vpop.xlane.xlu0 %1070
        %v1072 = vadd.f32 %v1038, %v1039
        %1073 = vadd.xlane.f32.xlu0 %v1072
        %v1074 = vpop.xlane.xlu0 %1073
        %v1075 = vadd.f32 %v1040, %v1041
        %1076 = vadd.xlane.f32.xlu0 %v1075
        %v1077 = vpop.xlane.xlu0 %1076
        %v1078 = vadd.f32 %v1042, %v1043
        %1079 = vadd.xlane.f32.xlu0 %v1078
        %v1080 = vpop.xlane.xlu0 %1079
        %v1081 = vadd.f32 %v1044, %v1045
        %1082 = vadd.xlane.f32.xlu0 %v1081
        %v1083 = vpop.xlane.xlu0 %1082
        %v1084 = vadd.f32 %v1046, %v1047
        %1085 = vadd.xlane.f32.xlu0 %v1084
        %v1086 = vpop.xlane.xlu0 %1085
        %v1087 = vrsqrt.pop %v1050
        %v1088 = vrsqrt.pop %v1053
        %v1089 = vrsqrt.pop %v1056
        %v1090 = vrsqrt.pop %v1059
        %v1091 = vrsqrt.pop %v1062
        %v1092 = vrsqrt.pop %v1065
        %v1093 = vrsqrt.pop %v1068
        %v1094 = vrsqrt.pop %v1071
        %v1095 = vrsqrt.pop %v1074
        %v1096 = vrsqrt.pop %v1077
        %v1097 = vrsqrt.pop %v1080
        %v1098 = vrsqrt.pop %v1083
        %v1099 = vrsqrt.pop %v1086
        %v1100 = vmin.f32 %v1087, 1000000.0
        %v1101 = vmin.f32 %v1088, 1000000.0
        %v1102 = vmin.f32 %v1089, 1000000.0
        %v1103 = vmin.f32 %v1090, 1000000.0
        %v1104 = vmin.f32 %v1091, 1000000.0
        %v1105 = vmin.f32 %v1092, 1000000.0
        %v1106 = vmin.f32 %v1093, 1000000.0
        %v1107 = vmin.f32 %v1094, 1000000.0
        %v1108 = vmin.f32 %v1095, 1000000.0
        %v1109 = vmin.f32 %v1096, 1000000.0
        %v1110 = vmin.f32 %v1097, 1000000.0
        %v1111 = vmin.f32 %v1098, 1000000.0
        %v1112 = vmin.f32 %v1099, 1000000.0
        %v1113 = vmul.f32 %v996, %v1100
        %v1114 = vmul.f32 %v997, %v1100
        %v1115 = vmul.f32 %v998, %v1101
        %v1116 = vmul.f32 %v999, %v1101
        %v1117 = vmul.f32 %v1000, %v1102
        %v1118 = vmul.f32 %v1001, %v1102
        %v1119 = vmul.f32 %v1002, %v1103
        %v1120 = vmul.f32 %v1003, %v1103
        %v1121 = vmul.f32 %v1004, %v1104
        %v1122 = vmul.f32 %v1005, %v1104
        %v1123 = vmul.f32 %v1006, %v1105
        %v1124 = vmul.f32 %v1007, %v1105
        %v1125 = vmul.f32 %v1008, %v1106
        %v1126 = vmul.f32 %v1009, %v1106
        %v1127 = vmul.f32 %v1010, %v1107
        %v1128 = vmul.f32 %v1011, %v1107
        %v1129 = vmul.f32 %v1012, %v1108
        %v1130 = vmul.f32 %v1013, %v1108
        %v1131 = vmul.f32 %v1014, %v1109
        %v1132 = vmul.f32 %v1015, %v1109
        %v1133 = vmul.f32 %v1016, %v1110
        %v1134 = vmul.f32 %v1017, %v1110
        %v1135 = vmul.f32 %v1018, %v1111
        %v1136 = vmul.f32 %v1019, %v1111
        %v1137 = vmul.f32 %v1020, %v1112
        %v1138 = vmul.f32 %v1021, %v1112
        %v1139 = vld [vmem:[#allocation8] sm:$0xff]
        %v1140 = vld [vmem:[#allocation8 + $0x8] sm:$0xff]
        %v1141 = vld [vmem:[#allocation8 + $0x10] sm:$0xff]
        %v1142 = vld [vmem:[#allocation8 + $0x18] sm:$0xff]
        %v1143 = vld [vmem:[#allocation8 + $0x20] sm:$0xff]
        %v1144 = vld [vmem:[#allocation8 + $0x28] sm:$0xff]
        %v1145 = vld [vmem:[#allocation8 + $0x30] sm:$0xff]
        %v1146 = vld [vmem:[#allocation8 + $0x38] sm:$0xff]
        %v1147 = vld [vmem:[#allocation8 + $0x40] sm:$0xff]
        %v1148 = vld [vmem:[#allocation8 + $0x48] sm:$0xff]
        %v1149 = vld [vmem:[#allocation8 + $0x50] sm:$0xff]
        %v1150 = vld [vmem:[#allocation8 + $0x58] sm:$0xff]
        %v1151 = vld [vmem:[#allocation8 + $0x60] sm:$0xff]
        %v1152 = vld [vmem:[#allocation8 + $0x68] sm:$0xff]
        %v1153 = vld [vmem:[#allocation8 + $0x70] sm:$0xff]
        %v1154 = vld [vmem:[#allocation8 + $0x78] sm:$0xff]
        %v1155 = vld [vmem:[#allocation8 + $0x80] sm:$0xff]
        %v1156 = vld [vmem:[#allocation8 + $0x88] sm:$0xff]
        %v1157 = vld [vmem:[#allocation8 + $0x90] sm:$0xff]
        %v1158 = vld [vmem:[#allocation8 + $0x98] sm:$0xff]
        %v1159 = vld [vmem:[#allocation8 + $0xa0] sm:$0xff]
        %v1160 = vld [vmem:[#allocation8 + $0xa8] sm:$0xff]
        %v1161 = vld [vmem:[#allocation8 + $0xb0] sm:$0xff]
        %v1162 = vld [vmem:[#allocation8 + $0xb8] sm:$0xff]
        %v1163 = vld [vmem:[#allocation8 + $0xc0] sm:$0xff]
        %v1164 = vld [vmem:[#allocation8 + $0xc8] sm:$0xff]
        %v1165 = vld [vmem:[#allocation8 + $0xd0] sm:$0xff]
        %v1166 = vld [vmem:[#allocation8 + $0xd8] sm:$0xff]
        %v1167 = vld [vmem:[#allocation8 + $0xe0] sm:$0xff]
        %v1168 = vld [vmem:[#allocation8 + $0xe8] sm:$0xff]
        %v1169 = vld [vmem:[#allocation8 + $0xf0] sm:$0xff]
        %v1170 = vld [vmem:[#allocation8 + $0xf8] sm:$0xff]
        %v1171 = vld [vmem:[%s6] sm:$0x1]
        %v1173 = vlaneseq
        %v1174 = vshrl.u32 %v1173, 7
        %v1175 = vsub.s32 0, %v1174
        %v1176 = vrot.slane %v1171, %v1175
        %1178 = vmatprep.subr.mxu0 0.0
        %1179 = vmatpush1.msra.mxu0 %v1139
        %1180 = vmatprep.subr.mxu0 0.0
        %1181 = vmatpush1.msra.mxu0 %v1140
        %1182 = vmatprep.subr.mxu0 0.0
        %1183 = vmatpush1.msra.mxu0 %v1141
        %1184 = vmatprep.subr.mxu0 0.0
        %1185 = vmatpush1.msra.mxu0 %v1142
        %1186 = vmatprep.subr.mxu0 0.0
        %1187 = vmatpush1.msra.mxu0 %v1143
        %1188 = vmatprep.subr.mxu0 0.0
        %1189 = vmatpush1.msra.mxu0 %v1144
        %1190 = vmatprep.subr.mxu0 0.0
        %1191 = vmatpush1.msra.mxu0 %v1145
        %1192 = vmatprep.subr.mxu0 0.0
        %1193 = vmatpush1.msra.mxu0 %v1146
        %1194 = vmatprep.subr.mxu0 0.0
        %1195 = vmatpush1.msra.mxu0 %v1147
        %1196 = vmatprep.subr.mxu0 0.0
        %1197 = vmatpush1.msra.mxu0 %v1148
        %1198 = vmatprep.subr.mxu0 0.0
        %1199 = vmatpush1.msra.mxu0 %v1149
        %1200 = vmatprep.subr.mxu0 0.0
        %1201 = vmatpush1.msra.mxu0 %v1150
        %1202 = vmatprep.subr.mxu0 0.0
        %1203 = vmatpush1.msra.mxu0 %v1151
        %1204 = vmatprep.subr.mxu0 0.0
        %1205 = vmatpush1.msra.mxu0 %v1152
        %1206 = vmatprep.subr.mxu0 0.0
        %1207 = vmatpush1.msra.mxu0 %v1153
        %1208 = vmatprep.subr.mxu0 0.0
        %1209 = vmatpush1.msra.mxu0 %v1154
        %1210 = vmatprep.subr.mxu0 0.0
        %1211 = vmatpush1.msra.mxu0 %v1155
        %1212 = vmatprep.subr.mxu0 0.0
        %1213 = vmatpush1.msra.mxu0 %v1156
        %1214 = vmatprep.subr.mxu0 0.0
        %1215 = vmatpush1.msra.mxu0 %v1157
        %1216 = vmatprep.subr.mxu0 0.0
        %1217 = vmatpush1.msra.mxu0 %v1158
        %1218 = vmatprep.subr.mxu0 0.0
        %1219 = vmatpush1.msra.mxu0 %v1159
        %1220 = vmatprep.subr.mxu0 0.0
        %1221 = vmatpush1.msra.mxu0 %v1160
        %1222 = vmatprep.subr.mxu0 0.0
        %1223 = vmatpush1.msra.mxu0 %v1161
        %1224 = vmatprep.subr.mxu0 0.0
        %1225 = vmatpush1.msra.mxu0 %v1162
        %1226 = vmatprep.subr.mxu0 0.0
        %1227 = vmatpush1.msra.mxu0 %v1163
        %1228 = vmatprep.subr.mxu0 0.0
        %1229 = vmatpush1.msra.mxu0 %v1164
        %1230 = vmatprep.subr.mxu0 0.0
        %1231 = vmatpush1.msra.mxu0 %v1165
        %1232 = vmatprep.subr.mxu0 0.0
        %1233 = vmatpush1.msra.mxu0 %v1166
        %1234 = vmatprep.subr.mxu0 0.0
        %1235 = vmatpush1.msra.mxu0 %v1167
        %1236 = vmatprep.subr.mxu0 0.0
        %1237 = vmatpush1.msra.mxu0 %v1168
        %1238 = vmatprep.subr.mxu0 0.0
        %1239 = vmatpush1.msra.mxu0 %v1169
        %1240 = vmatprep.subr.mxu0 0.0
        %1241 = vmatpush1.msra.mxu0 %v1170
        %1242 = vmatprep.mubr.f32.mxu0 %v1114
        %1243 = vmatmul.mubr.f32.gmra.mrb[0].mxu0 %v1113
        %v1244 = vpop.f32.mrb[0].mxu0
        %v1245 = vadd.f32 %v1176, %v1244
        %v1246 = vpop.f32.mrb[0].mxu0
        %1247 = vmatprep.mubr.f32.mxu0 %v1116
        %1248 = vmatmul.mubr.f32.gmra.mrb[0].mxu0 %v1115
        %v1249 = vpop.f32.mrb[0].mxu0
        %v1250 = vadd.f32 %v1176, %v1249
        %v1251 = vpop.f32.mrb[0].mxu0
        %1252 = vmatprep.mubr.f32.mxu0 %v1118
        %1253 = vmatmul.mubr.f32.gmra.mrb[0].mxu0 %v1117
        %v1254 = vpop.f32.mrb[0].mxu0
        %v1255 = vadd.f32 %v1176, %v1254
        %v1256 = vpop.f32.mrb[0].mxu0
        %1257 = vmatprep.mubr.f32.mxu0 %v1120
        %1258 = vmatmul.mubr.f32.gmra.mrb[0].mxu0 %v1119
        %v1259 = vpop.f32.mrb[0].mxu0
        %v1260 = vadd.f32 %v1176, %v1259
        %v1261 = vpop.f32.mrb[0].mxu0
        %1262 = vmatprep.mubr.f32.mxu0 %v1122
        %1263 = vmatmul.mubr.f32.gmra.mrb[0].mxu0 %v1121
        %v1264 = vpop.f32.mrb[0].mxu0
        %v1265 = vadd.f32 %v1176, %v1264
        %v1266 = vpop.f32.mrb[0].mxu0
        %1267 = vmatprep.mubr.f32.mxu0 %v1124
        %1268 = vmatmul.mubr.f32.gmra.mrb[0].mxu0 %v1123
        %v1269 = vpop.f32.mrb[0].mxu0
        %v1270 = vadd.f32 %v1176, %v1269
        %v1271 = vpop.f32.mrb[0].mxu0
        %1272 = vmatprep.mubr.f32.mxu0 %v1126
        %1273 = vmatmul.mubr.f32.gmra.mrb[0].mxu0 %v1125
        %v1274 = vpop.f32.mrb[0].mxu0
        %v1275 = vadd.f32 %v1176, %v1274
        %v1276 = vpop.f32.mrb[0].mxu0
        %1277 = vmatprep.mubr.f32.mxu0 %v1128
        %1278 = vmatmul.mubr.f32.gmra.mrb[0].mxu0 %v1127
        %v1279 = vpop.f32.mrb[0].mxu0
        %v1280 = vadd.f32 %v1176, %v1279
        %v1281 = vpop.f32.mrb[0].mxu0
        %1282 = vmatprep.mubr.f32.mxu0 %v1130
        %1283 = vmatmul.mubr.f32.gmra.mrb[0].mxu0 %v1129
        %v1284 = vpop.f32.mrb[0].mxu0
        %v1285 = vadd.f32 %v1176, %v1284
        %v1286 = vpop.f32.mrb[0].mxu0
        %1287 = vmatprep.mubr.f32.mxu0 %v1132
        %1288 = vmatmul.mubr.f32.gmra.mrb[0].mxu0 %v1131
        %v1289 = vpop.f32.mrb[0].mxu0
        %v1290 = vadd.f32 %v1176, %v1289
        %v1291 = vpop.f32.mrb[0].mxu0
        %1292 = vmatprep.mubr.f32.mxu0 %v1134
        %1293 = vmatmul.mubr.f32.gmra.mrb[0].mxu0 %v1133
        %v1294 = vpop.f32.mrb[0].mxu0
        %v1295 = vadd.f32 %v1176, %v1294
        %v1296 = vpop.f32.mrb[0].mxu0
        %1297 = vmatprep.mubr.f32.mxu0 %v1136
        %1298 = vmatmul.mubr.f32.gmra.mrb[0].mxu0 %v1135
        %v1299 = vpop.f32.mrb[0].mxu0
        %v1300 = vadd.f32 %v1176, %v1299
        %v1301 = vpop.f32.mrb[0].mxu0
        %1302 = vmatprep.mubr.f32.mxu0 %v1138
        %1303 = vmatmul.mubr.f32.gmra.mrb[0].mxu0 %v1137
        %v1304 = vpop.f32.mrb[0].mxu0
        %v1305 = vadd.f32 %v1176, %v1304
        %v1306 = vpop.f32.mrb[0].mxu0
        %1307 = vdwg.mxu0
        %1308 = vst [vmem:[%s340] sm:$0xff] %v1245
        %1309 = vst [vmem:[%s340 + $0x8] sm:$0xff] %v1250
        %1310 = vst [vmem:[%s340 + $0x10] sm:$0xff] %v1255
        %1311 = vst [vmem:[%s340 + $0x18] sm:$0xff] %v1260
        %1312 = vst [vmem:[%s340 + $0x20] sm:$0xff] %v1265
        %1313 = vst [vmem:[%s340 + $0x28] sm:$0xff] %v1270
        %1314 = vst [vmem:[%s340 + $0x30] sm:$0xff] %v1275
        %1315 = vst [vmem:[%s340 + $0x38] sm:$0xff] %v1280
        %1316 = vst [vmem:[%s340 + $0x40] sm:$0xff] %v1285
        %1317 = vst [vmem:[%s340 + $0x48] sm:$0xff] %v1290
        %1318 = vst [vmem:[%s340 + $0x50] sm:$0xff] %v1295
        %1319 = vst [vmem:[%s340 + $0x58] sm:$0xff] %v1300
        %1320 = vst [vmem:[%s340 + $0x60] sm:$0xff] %v1305
        %s1321 = sand.u32 %s186, 1
        %s1322 = scalar_lea.sflag [#allocation4], %s1321
        %s1323 = sand.u32 %s186, 1
        %s1324 = smul.addr %s1323, 104
        %s1325 = scalar_lea.vmem [#allocation10], %s1324
        // Predicated region
        $region65: #{tpu_custom_call.1} parent=47 // pred_check
          %p1326 = pneg %p196
        $region66: #{tpu_custom_call.1} parent=47 // pred_check_branch
          %1328 = sbr.rel (%p1326) target = $region68
        $region67: #{tpu_custom_call.1} parent=47 // pred_region
          %s1329 = smul.u32 13, %s26
          %s1331 = ssub.s32 1664, 1664
          %1332 = vsyncadd %s1322, %s1331
          %s1333 = smul.addr %s1329, 128
          %s1334 = scalar_lea.hbm %s7, %s1333
          %s1335 = sshll.u32 %s1325, 4
          %s1336 = int_to_ptr.vmem [resolvable:$true] %s1335
          %1341 = dma.vmem_to_hbm [thread:$0]  %s1336, 1664, %s1334, %s1322, 128, 128, 8
        $region68: #{tpu_custom_call.1} parent=47 // pred_fallthru
          _
      $region48: #{tpu_custom_call.1} parent=5 // pred_fallthru
        _
      %p1342 = scmp.le.s32.totalorder 2, %s21
      // Predicated region
      $region69: #{tpu_custom_call.1} parent=5 // pred_check
        %p1343 = pneg %p1342
      $region70: #{tpu_custom_call.1} parent=5 // pred_check_branch
        %1345 = sbr.rel (%p1343) target = $region72
      $region71: #{tpu_custom_call.1} parent=5 // pred_region
        %s1346 = ssub.s32 %s21, 2
        // Predicated region
        $region73: #{tpu_custom_call.1} parent=71 // pred_check
          %p1347 = pneg %p202
        $region74: #{tpu_custom_call.1} parent=71 // pred_check_branch
          %1349 = sbr.rel (%p1347) target = $region76
        $region75: #{tpu_custom_call.1} parent=71 // pred_region
          %s1350 = sand.u32 %s187, 1
          %s1351 = scalar_lea.sflag [#allocation4], %s1350
          %s1352 = sand.u32 %s187, 1
          %s1353 = smul.addr %s1352, 104
          %s1354 = scalar_lea.vmem [#allocation10], %s1353
          %1355 = dma.done %s1351, 1664
        $region76: #{tpu_custom_call.1} parent=71 // pred_fallthru
          _
      $region72: #{tpu_custom_call.1} parent=5 // pred_fallthru
        _
    $region6: #{tpu_custom_call.1} parent=1 // loop_footer
      %s25 = sadd.s32 1, %s21
    $region7: #{tpu_custom_call.1} parent=1 // loop_footer_branch
      %20 = sbr.rel target = $region3
    $region8: #{tpu_custom_call.1} parent=1 // loop_exit
      _
    %1356 = vsyncpa [#allocation3], 1
    %s1357 = scalar_lea.sflag [#allocation3], 1
    %1358 = vsyncpa %s1357, 1
    %1359 = vsyncpa [#allocation6], 1
    %1360 = vsyncpa [#allocation9], 1
    %1361 = vsyncpa [#allocation4], 1
    %s1362 = scalar_lea.sflag [#allocation4], 1
    %1363 = vsyncpa %s1362, 1

// kernel: tpu_custom_call.1
$region0: #{tpu_custom_call.1}
  #allocation0 [shape = 'u32[]', space=smem, size = 0x4, offset = 0x4, fixed_abs, tag = 'smem constant byte address 0x4 - core index']
  #allocation1 [shape = 'u32[144,128]{1,0:T(1,128)}', space=vmem, size = 0x12000, scoped, tag = 'internal scratch']
  %s0 = inlined_call_operand.hbm [shape: f32[208,128], index: 0, kind: input, shape index: {}]
  %s1 = inlined_call_operand.hbm [shape: f32[128,256], index: 1, kind: input, shape index: {}]
  %s2 = inlined_call_operand.vmem [shape: f32[1,256], index: 2, kind: input, shape index: {}]
  %s3 = inlined_call_operand.hbm [shape: f32[256,256], index: 3, kind: input, shape index: {}]
  %s4 = inlined_call_operand.vmem [shape: f32[1,256], index: 4, kind: input, shape index: {}]
  %s5 = inlined_call_operand.hbm [shape: f32[256,128], index: 5, kind: input, shape index: {}]
  %s6 = inlined_call_operand.vmem [shape: f32[1,128], index: 6, kind: input, shape index: {}]
  %s7 = inlined_call_operand.hbm [shape: f32[208,128], index: 7, kind: output, shape index: {}]
  %s8 = sld [smem:[#allocation0]]
  $region77: #{tpu_custom_call.1} parent=0
    _
  %s10 = ssub.s32 1, %s8
  %s11 = scalar_select 0, %s10, %s8
  $region1: #{tpu_custom_call.1} parent=0
    #allocation2 [shape = 'u8[106496]{0}', space=vmem, size = 0x1a000, scoped, tag = 'input window, operand 0']
    #allocation3 [shape = 's32[2]{0}', space=sflag, size = 0x8, scoped, tag = 'scoped memory for tpu_custom_call.1']
    #allocation4 [shape = 's32[2]{0}', space=sflag, size = 0x8, scoped, tag = 'scoped memory for tpu_custom_call.1']
    #allocation5 [shape = 'u8[131072]{0}', space=vmem, size = 0x20000, scoped, tag = 'input window, operand 1, single buffered']
    #allocation6 [shape = 's32[1]{0}', space=sflag, size = 0x4, scoped, tag = 'scoped memory for tpu_custom_call.1']
    #allocation7 [shape = 'u8[262144]{0}', space=vmem, size = 0x40000, scoped, tag = 'input window, operand 3, single buffered']
    #allocation8 [shape = 'u8[131072]{0}', space=vmem, size = 0x20000, scoped, tag = 'input window, operand 5, single buffered']
    #allocation9 [shape = 's32[1]{0}', space=sflag, size = 0x4, scoped, tag = 'scoped memory for tpu_custom_call.1']
    #allocation10 [shape = 'u8[106496]{0}', space=vmem, size = 0x1a000, scoped, tag = 'output window, operand 0']
    %12 = vsyncpa [#allocation3], 0
    %s13 = scalar_lea.sflag [#allocation3], 1
    %14 = vsyncpa %s13, 0
    %15 = vsyncpa [#allocation6], 0
    %16 = vsyncpa [#allocation9], 0
    %17 = vsyncpa [#allocation4], 0
    %s18 = scalar_lea.sflag [#allocation4], 1
    %19 = vsyncpa %s18, 0
    loop: start=0, step=1, limit=4
    $region2: #{tpu_custom_call.1} parent=1 // loop_pre_header
      _
    $region3: #{tpu_custom_call.1} parent=1 // loop_header
      %s21 = sphi 0, %s25
      %p22 = scmp.ge.s32.totalorder %s21, 4
      %s31 = sphi 0, %s33
      %s34 = sphi 0, %s31
      %s35 = sphi 0, %s34
      %s51 = sphi 0, %s35
      %s55 = sphi 0, %s55
      %s57 = sphi 0, %s55
      %s58 = sphi 0, %s57
      %s72 = sphi 0, %s58
      %s76 = sphi 0, %s76
      %s78 = sphi 0, %s76
      %s79 = sphi 0, %s78
      %s93 = sphi 0, %s79
      %s97 = sphi 0, %s97
      %s99 = sphi 0, %s97
      %s100 = sphi 0, %s99
      %s114 = sphi 0, %s100
      %s118 = sphi 0, %s118
      %s120 = sphi 0, %s118
      %s121 = sphi 0, %s120
      %s135 = sphi 0, %s121
      %s139 = sphi 0, %s139
      %s141 = sphi 0, %s139
      %s142 = sphi 0, %s141
      %s156 = sphi 0, %s142
      %s160 = sphi 0, %s160
      %s162 = sphi 0, %s160
      %s163 = sphi 0, %s162
      %s177 = sphi 0, %s163
      %s183 = sphi 0, %s185
      %s186 = sphi 0, %s183
      %s187 = sphi 0, %s186
      %s203 = sphi 0, %s187
    $region4: #{tpu_custom_call.1} parent=1 // loop_header_branch
      %24 = sbr.rel (%p22) target = $region8
    $region5: #{tpu_custom_call.1} parent=1 // loop_body
      %s26 = ssub.s32 %s21, 1
      %s27 = ssub.s32 %s21, 2
      %s28 = sadd.s32 %s21, 1
      %s29 = ssub.s32 %s21, %s28
      %p30 = scmp.eq.s32.totalorder %s29, 0
      %s32 = sadd.s32 %s31, 1
      %s33 = scalar_select %p30, %s31, %s32
      %p36 = pneg %p30
      %p37 = scmp.eq.s32.totalorder %s21, 1
      %p38 = por %p36, %p37
      %p39 = scmp.ne.s32.totalorder %s31, %s34
      %p40 = scmp.eq.s32.totalorder %s21, 0
      %p41 = por %p39, %p40
      %p42 = scmp.ne.s32.totalorder %s31, %s34
      %p43 = scmp.eq.s32.totalorder %s26, 1
      %p44 = por %p42, %p43
      %p45 = scmp.ne.s32.totalorder %s34, %s35
      %p46 = scmp.eq.s32.totalorder %s26, 0
      %p47 = por %p45, %p46
      %p48 = scmp.ne.s32.totalorder %s34, %s35
      %p49 = scmp.eq.s32.totalorder %s27, 1
      %p50 = por %p48, %p49
      %p52 = scmp.ne.s32.totalorder %s35, %s51
      %p53 = scmp.eq.s32.totalorder %s27, 0
      %p54 = por %p52, %p53
      %s56 = sadd.s32 %s55, 1
      %p59 = scmp.eq.s32.totalorder %s21, 1
      %p60 = scmp.ne.s32.totalorder %s55, %s57
      %p61 = scmp.eq.s32.totalorder %s21, 0
      %p62 = por %p60, %p61
      %p63 = scmp.ne.s32.totalorder %s55, %s57
      %p64 = scmp.eq.s32.totalorder %s26, 1
      %p65 = por %p63, %p64
      %p66 = scmp.ne.s32.totalorder %s57, %s58
      %p67 = scmp.eq.s32.totalorder %s26, 0
      %p68 = por %p66, %p67
      %p69 = scmp.ne.s32.totalorder %s57, %s58
      %p70 = scmp.eq.s32.totalorder %s27, 1
      %p71 = por %p69, %p70
      %p73 = scmp.ne.s32.totalorder %s58, %s72
      %p74 = scmp.eq.s32.totalorder %s27, 0
      %p75 = por %p73, %p74
      %s77 = sadd.s32 %s76, 1
      %p80 = scmp.eq.s32.totalorder %s21, 1
      %p81 = scmp.ne.s32.totalorder %s76, %s78
      %p82 = scmp.eq.s32.totalorder %s21, 0
      %p83 = por %p81, %p82
      %p84 = scmp.ne.s32.totalorder %s76, %s78
      %p85 = scmp.eq.s32.totalorder %s26, 1
      %p86 = por %p84, %p85
      %p87 = scmp.ne.s32.totalorder %s78, %s79
      %p88 = scmp.eq.s32.totalorder %s26, 0
      %p89 = por %p87, %p88
      %p90 = scmp.ne.s32.totalorder %s78, %s79
      %p91 = scmp.eq.s32.totalorder %s27, 1
      %p92 = por %p90, %p91
      %p94 = scmp.ne.s32.totalorder %s79, %s93
      %p95 = scmp.eq.s32.totalorder %s27, 0
      %p96 = por %p94, %p95
      %s98 = sadd.s32 %s97, 1
      %p101 = scmp.eq.s32.totalorder %s21, 1
      %p102 = scmp.ne.s32.totalorder %s97, %s99
      %p103 = scmp.eq.s32.totalorder %s21, 0
      %p104 = por %p102, %p103
      %p105 = scmp.ne.s32.totalorder %s97, %s99
      %p106 = scmp.eq.s32.totalorder %s26, 1
      %p107 = por %p105, %p106
      %p108 = scmp.ne.s32.totalorder %s99, %s100
      %p109 = scmp.eq.s32.totalorder %s26, 0
      %p110 = por %p108, %p109
      %p111 = scmp.ne.s32.totalorder %s99, %s100
      %p112 = scmp.eq.s32.totalorder %s27, 1
      %p113 = por %p111, %p112
      %p115 = scmp.ne.s32.totalorder %s100, %s114
      %p116 = scmp.eq.s32.totalorder %s27, 0
      %p117 = por %p115, %p116
      %s119 = sadd.s32 %s118, 1
      %p122 = scmp.eq.s32.totalorder %s21, 1
      %p123 = scmp.ne.s32.totalorder %s118, %s120
      %p124 = scmp.eq.s32.totalorder %s21, 0
      %p125 = por %p123, %p124
      %p126 = scmp.ne.s32.totalorder %s118, %s120
      %p127 = scmp.eq.s32.totalorder %s26, 1
      %p128 = por %p126, %p127
      %p129 = scmp.ne.s32.totalorder %s120, %s121
      %p130 = scmp.eq.s32.totalorder %s26, 0
      %p131 = por %p129, %p130
      %p132 = scmp.ne.s32.totalorder %s120, %s121
      %p133 = scmp.eq.s32.totalorder %s27, 1
      %p134 = por %p132, %p133
      %p136 = scmp.ne.s32.totalorder %s121, %s135
      %p137 = scmp.eq.s32.totalorder %s27, 0
      %p138 = por %p136, %p137
      %s140 = sadd.s32 %s139, 1
      %p143 = scmp.eq.s32.totalorder %s21, 1
      %p144 = scmp.ne.s32.totalorder %s139, %s141
      %p145 = scmp.eq.s32.totalorder %s21, 0
      %p146 = por %p144, %p145
      %p147 = scmp.ne.s32.totalorder %s139, %s141
      %p148 = scmp.eq.s32.totalorder %s26, 1
      %p149 = por %p147, %p148
      %p150 = scmp.ne.s32.totalorder %s141, %s142
      %p151 = scmp.eq.s32.totalorder %s26, 0
      %p152 = por %p150, %p151
      %p153 = scmp.ne.s32.totalorder %s141, %s142
      %p154 = scmp.eq.s32.totalorder %s27, 1
      %p155 = por %p153, %p154
      %p157 = scmp.ne.s32.totalorder %s142, %s156
      %p158 = scmp.eq.s32.totalorder %s27, 0
      %p159 = por %p157, %p158
      %s161 = sadd.s32 %s160, 1
      %p164 = scmp.eq.s32.totalorder %s21, 1
      %p165 = scmp.ne.s32.totalorder %s160, %s162
      %p166 = scmp.eq.s32.totalorder %s21, 0
      %p167 = por %p165, %p166
      %p168 = scmp.ne.s32.totalorder %s160, %s162
      %p169 = scmp.eq.s32.totalorder %s26, 1
      %p170 = por %p168, %p169
      %p171 = scmp.ne.s32.totalorder %s162, %s163
      %p172 = scmp.eq.s32.totalorder %s26, 0
      %p173 = por %p171, %p172
      %p174 = scmp.ne.s32.totalorder %s162, %s163
      %p175 = scmp.eq.s32.totalorder %s27, 1
      %p176 = por %p174, %p175
      %p178 = scmp.ne.s32.totalorder %s163, %s177
      %p179 = scmp.eq.s32.totalorder %s27, 0
      %p180 = por %p178, %p179
      %s181 = ssub.s32 %s21, %s28
      %p182 = scmp.eq.s32.totalorder %s181, 0
      %s184 = sadd.s32 %s183, 1
      %s185 = scalar_select %p182, %s183, %s184
      %p188 = pneg %p182
      %p189 = scmp.eq.s32.totalorder %s21, 1
      %p190 = por %p188, %p189
      %p191 = scmp.ne.s32.totalorder %s183, %s186
      %p192 = scmp.eq.s32.totalorder %s21, 0
      %p193 = por %p191, %p192
      %p194 = scmp.ne.s32.totalorder %s183, %s186
      %p195 = scmp.eq.s32.totalorder %s26, 1
      %p196 = por %p194, %p195
      %p197 = scmp.ne.s32.totalorder %s186, %s187
      %p198 = scmp.eq.s32.totalorder %s26, 0
      %p199 = por %p197, %p198
      %p200 = scmp.ne.s32.totalorder %s186, %s187
      %p201 = scmp.eq.s32.totalorder %s27, 1
      %p202 = por %p200, %p201
      %p204 = scmp.ne.s32.totalorder %s187, %s203
      %p205 = scmp.eq.s32.totalorder %s27, 0
      %p206 = por %p204, %p205
      %p207 = scmp.le.s32.totalorder 1, %s21
      %p208 = scmp.lt.s32.totalorder %s21, 3
      %p209 = pnand %p207, %p208
      %p210 = pneg %p209
      // Predicated region
      $region9: #{tpu_custom_call.1} parent=5 // pred_check
        _
      $region10: #{tpu_custom_call.1} parent=5 // pred_check_branch
        %212 = sbr.rel (%p209) target = $region12
      $region11: #{tpu_custom_call.1} parent=5 // pred_region
        %s213 = ssub.s32 %s21, 1
        // Predicated region
        $region13: #{tpu_custom_call.1} parent=11 // pred_check
          %p214 = pneg %p68
        $region14: #{tpu_custom_call.1} parent=11 // pred_check_branch
          %216 = sbr.rel (%p214) target = $region16
        $region15: #{tpu_custom_call.1} parent=11 // pred_region
          %s218 = ssub.s32 4096, 4096
          %219 = vsyncadd [#allocation6], %s218
          %s220 = sshll.u32 [#allocation5], 4
          %s221 = int_to_ptr.vmem [resolvable:$true] %s220
          %226 = dma.hbm_to_vmem [thread:$0]  %s1, 4096, %s221, [#allocation6], 256, 256, 16
        $region16: #{tpu_custom_call.1} parent=11 // pred_fallthru
          _
        // Predicated region
        $region17: #{tpu_custom_call.1} parent=11 // pred_check
          %p227 = pneg %p89
        $region18: #{tpu_custom_call.1} parent=11 // pred_check_branch
          %229 = sbr.rel (%p227) target = $region20
        $region19: #{tpu_custom_call.1} parent=11 // pred_region
          _
        $region20: #{tpu_custom_call.1} parent=11 // pred_fallthru
          _
        // Predicated region
        $region21: #{tpu_custom_call.1} parent=11 // pred_check
          %p230 = pneg %p110
        $region22: #{tpu_custom_call.1} parent=11 // pred_check_branch
          %232 = sbr.rel (%p230) target = $region24
        $region23: #{tpu_custom_call.1} parent=11 // pred_region
          %s234 = ssub.s32 8192, 8192
          %235 = vsyncadd [#allocation6], %s234
          %s236 = sshll.u32 [#allocation7], 4
          %s237 = int_to_ptr.vmem [resolvable:$true] %s236
          %242 = dma.hbm_to_vmem [thread:$0]  %s3, 8192, %s237, [#allocation6], 256, 256, 16
        $region24: #{tpu_custom_call.1} parent=11 // pred_fallthru
          _
        // Predicated region
        $region25: #{tpu_custom_call.1} parent=11 // pred_check
          %p243 = pneg %p131
        $region26: #{tpu_custom_call.1} parent=11 // pred_check_branch
          %245 = sbr.rel (%p243) target = $region28
        $region27: #{tpu_custom_call.1} parent=11 // pred_region
          _
        $region28: #{tpu_custom_call.1} parent=11 // pred_fallthru
          _
        // Predicated region
        $region29: #{tpu_custom_call.1} parent=11 // pred_check
          %p246 = pneg %p152
        $region30: #{tpu_custom_call.1} parent=11 // pred_check_branch
          %248 = sbr.rel (%p246) target = $region32
        $region31: #{tpu_custom_call.1} parent=11 // pred_region
          %s250 = ssub.s32 4096, 4096
          %251 = vsyncadd [#allocation9], %s250
          %s252 = sshll.u32 [#allocation8], 4
          %s253 = int_to_ptr.vmem [resolvable:$true] %s252
          %258 = dma.hbm_to_vmem [thread:$0]  %s5, 4096, %s253, [#allocation9], 128, 128, 8
        $region32: #{tpu_custom_call.1} parent=11 // pred_fallthru
          _
        // Predicated region
        $region33: #{tpu_custom_call.1} parent=11 // pred_check
          %p259 = pneg %p173
        $region34: #{tpu_custom_call.1} parent=11 // pred_check_branch
          %261 = sbr.rel (%p259) target = $region36
        $region35: #{tpu_custom_call.1} parent=11 // pred_region
          _
        $region36: #{tpu_custom_call.1} parent=11 // pred_fallthru
          _
      $region12: #{tpu_custom_call.1} parent=5 // pred_fallthru
        _
      %p262 = scmp.lt.s32.totalorder %s21, 2
      // Predicated region
      $region37: #{tpu_custom_call.1} parent=5 // pred_check
        %p263 = pneg %p262
      $region38: #{tpu_custom_call.1} parent=5 // pred_check_branch
        %265 = sbr.rel (%p263) target = $region40
      $region39: #{tpu_custom_call.1} parent=5 // pred_region
        // Predicated region
        $region41: #{tpu_custom_call.1} parent=39 // pred_check
          %p266 = pneg %p41
        $region42: #{tpu_custom_call.1} parent=39 // pred_check_branch
          %268 = sbr.rel (%p266) target = $region44
        $region43: #{tpu_custom_call.1} parent=39 // pred_region
          %s269 = sand.u32 %s31, 1
          %s270 = scalar_lea.sflag [#allocation3], %s269
          %s271 = sand.u32 %s31, 1
          %s272 = smul.addr %s271, 104
          %s273 = scalar_lea.vmem [#allocation2], %s272
          %s274 = smul.u32 13, %s21
          %s276 = ssub.s32 1664, 1664
          %277 = vsyncadd %s270, %s276
          %s278 = smul.addr %s274, 128
          %s279 = scalar_lea.hbm %s0, %s278
          %s280 = sshll.u32 %s273, 4
          %s281 = int_to_ptr.vmem [resolvable:$true] %s280
          %286 = dma.hbm_to_vmem [thread:$0]  %s279, 1664, %s281, %s270, 128, 128, 8
        $region44: #{tpu_custom_call.1} parent=39 // pred_fallthru
          _
      $region40: #{tpu_custom_call.1} parent=5 // pred_fallthru
        _
      %p287 = scmp.le.s32.totalorder 1, %s21
      %p288 = scmp.lt.s32.totalorder %s21, 3
      %p289 = pnand %p287, %p288
      %p290 = pneg %p289
      // Predicated region
      $region45: #{tpu_custom_call.1} parent=5 // pred_check
        _
      $region46: #{tpu_custom_call.1} parent=5 // pred_check_branch
        %292 = sbr.rel (%p289) target = $region48
      $region47: #{tpu_custom_call.1} parent=5 // pred_region
        %s293 = ssub.s32 %s21, 1
        %s294 = sand.u32 %s34, 1
        %s295 = scalar_lea.sflag [#allocation3], %s294
        %s296 = sand.u32 %s34, 1
        %s297 = smul.addr %s296, 104
        %s298 = scalar_lea.vmem [#allocation2], %s297
        // Predicated region
        $region49: #{tpu_custom_call.1} parent=47 // pred_check
          %p299 = pneg %p47
        $region50: #{tpu_custom_call.1} parent=47 // pred_check_branch
          %301 = sbr.rel (%p299) target = $region52
        $region51: #{tpu_custom_call.1} parent=47 // pred_region
          %302 = dma.done %s295, 1664
        $region52: #{tpu_custom_call.1} parent=47 // pred_fallthru
          _
        // Predicated region
        $region53: #{tpu_custom_call.1} parent=47 // pred_check
          %p303 = pneg %p68
        $region54: #{tpu_custom_call.1} parent=47 // pred_check_branch
          %305 = sbr.rel (%p303) target = $region56
        $region55: #{tpu_custom_call.1} parent=47 // pred_region
          %306 = dma.done [#allocation6], 4096
        $region56: #{tpu_custom_call.1} parent=47 // pred_fallthru
          _
        // Predicated region
        $region57: #{tpu_custom_call.1} parent=47 // pred_check
          %p307 = pneg %p110
        $region58: #{tpu_custom_call.1} parent=47 // pred_check_branch
          %309 = sbr.rel (%p307) target = $region60
        $region59: #{tpu_custom_call.1} parent=47 // pred_region
          %310 = dma.done [#allocation6], 8192
        $region60: #{tpu_custom_call.1} parent=47 // pred_fallthru
          _
        // Predicated region
        $region61: #{tpu_custom_call.1} parent=47 // pred_check
          %p311 = pneg %p152
        $region62: #{tpu_custom_call.1} parent=47 // pred_check_branch
          %313 = sbr.rel (%p311) target = $region64
        $region63: #{tpu_custom_call.1} parent=47 // pred_region
          %314 = dma.done [#allocation9], 4096
        $region64: #{tpu_custom_call.1} parent=47 // pred_fallthru
          _
        %s315 = sand.u32 %s34, 1
        %s316 = scalar_lea.sflag [#allocation3], %s315
        %s317 = sand.u32 %s34, 1
        %s318 = smul.addr %s317, 104
        %s319 = scalar_lea.vmem [#allocation2], %s318
        %p320 = pneg %p47
        %p321 = pneg %p44
        %p322 = pneg %p68
        %p323 = pneg %p65
        %p324 = pneg %p89
        %p325 = pneg %p86
        %p326 = pneg %p110
        %p327 = pneg %p107
        %p328 = pneg %p131
        %p329 = pneg %p128
        %p330 = pneg %p152
        %p331 = pneg %p149
        %p332 = pneg %p173
        %p333 = pneg %p170
        %p334 = pneg %p199
        %p335 = pneg %p196
        %s336 = sand.u32 %s186, 1
        %s337 = scalar_lea.sflag [#allocation4], %s336
        %s338 = sand.u32 %s186, 1
        %s339 = smul.addr %s338, 104
        %s340 = scalar_lea.vmem [#allocation10], %s339
        %s341 = smul.u32 13, %s26
        %s342 = smul.u32 13, %s26
        %v343 = vld [vmem:[%s298] sm:$0xff]
        %v344 = vld [vmem:[%s298 + $0x8] sm:$0xff]
        %v345 = vld [vmem:[%s298 + $0x10] sm:$0xff]
        %v346 = vld [vmem:[%s298 + $0x18] sm:$0xff]
        %v347 = vld [vmem:[%s298 + $0x20] sm:$0xff]
        %v348 = vld [vmem:[%s298 + $0x28] sm:$0xff]
        %v349 = vld [vmem:[%s298 + $0x30] sm:$0xff]
        %v350 = vld [vmem:[%s298 + $0x38] sm:$0xff]
        %v351 = vld [vmem:[%s298 + $0x40] sm:$0xff]
        %v352 = vld [vmem:[%s298 + $0x48] sm:$0xff]
        %v353 = vld [vmem:[%s298 + $0x50] sm:$0xff]
        %v354 = vld [vmem:[%s298 + $0x58] sm:$0xff]
        %v355 = vld [vmem:[%s298 + $0x60] sm:$0xff]
        %v356 = vld [vmem:[#allocation5] sm:$0xff]
        %v357 = vld [vmem:[#allocation5 + $0x8] sm:$0xff]
        %v358 = vld [vmem:[#allocation5 + $0x10] sm:$0xff]
        %v359 = vld [vmem:[#allocation5 + $0x18] sm:$0xff]
        %v360 = vld [vmem:[#allocation5 + $0x20] sm:$0xff]
        %v361 = vld [vmem:[#allocation5 + $0x28] sm:$0xff]
        %v362 = vld [vmem:[#allocation5 + $0x30] sm:$0xff]
        %v363 = vld [vmem:[#allocation5 + $0x38] sm:$0xff]
        %v364 = vld [vmem:[#allocation5 + $0x40] sm:$0xff]
        %v365 = vld [vmem:[#allocation5 + $0x48] sm:$0xff]
        %v366 = vld [vmem:[#allocation5 + $0x50] sm:$0xff]
        %v367 = vld [vmem:[#allocation5 + $0x58] sm:$0xff]
        %v368 = vld [vmem:[#allocation5 + $0x60] sm:$0xff]
        %v369 = vld [vmem:[#allocation5 + $0x68] sm:$0xff]
        %v370 = vld [vmem:[#allocation5 + $0x70] sm:$0xff]
        %v371 = vld [vmem:[#allocation5 + $0x78] sm:$0xff]
        %v372 = vld [vmem:[#allocation5 + $0x80] sm:$0xff]
        %v373 = vld [vmem:[#allocation5 + $0x88] sm:$0xff]
        %v374 = vld [vmem:[#allocation5 + $0x90] sm:$0xff]
        %v375 = vld [vmem:[#allocation5 + $0x98] sm:$0xff]
        %v376 = vld [vmem:[#allocation5 + $0xa0] sm:$0xff]
        %v377 = vld [vmem:[#allocation5 + $0xa8] sm:$0xff]
        %v378 = vld [vmem:[#allocation5 + $0xb0] sm:$0xff]
        %v379 = vld [vmem:[#allocation5 + $0xb8] sm:$0xff]
        %v380 = vld [vmem:[#allocation5 + $0xc0] sm:$0xff]
        %v381 = vld [vmem:[#allocation5 + $0xc8] sm:$0xff]
        %v382 = vld [vmem:[#allocation5 + $0xd0] sm:$0xff]
        %v383 = vld [vmem:[#allocation5 + $0xd8] sm:$0xff]
        %v384 = vld [vmem:[#allocation5 + $0xe0] sm:$0xff]
        %v385 = vld [vmem:[#allocation5 + $0xe8] sm:$0xff]
        %v386 = vld [vmem:[#allocation5 + $0xf0] sm:$0xff]
        %v387 = vld [vmem:[#allocation5 + $0xf8] sm:$0xff]
        %v388 = vld [vmem:[%s2] sm:$0x3]
        %v390 = vlaneseq
        %v391 = vshrl.u32 %v390, 7
        %v392 = vsub.s32 0, %v391
        %v393 = vrot.slane %v388, %v392
        %v394 = vlaneseq
        %v395 = vshrl.u32 %v394, 7
        %v396 = vsub.s32 1, %v395
        %v397 = vrot.slane %v388, %v396
        %400 = vmatprep.subr.mxu0 %v357
        %401 = vmatpush1.msra.mxu0 %v356
        %402 = vmatprep.subr.mxu0 %v359
        %403 = vmatpush1.msra.mxu0 %v358
        %404 = vmatprep.subr.mxu0 %v361
        %405 = vmatpush1.msra.mxu0 %v360
        %406 = vmatprep.subr.mxu0 %v363
        %407 = vmatpush1.msra.mxu0 %v362
        %408 = vmatprep.subr.mxu0 %v365
        %409 = vmatpush1.msra.mxu0 %v364
        %410 = vmatprep.subr.mxu0 %v367
        %411 = vmatpush1.msra.mxu0 %v366
        %412 = vmatprep.subr.mxu0 %v369
        %413 = vmatpush1.msra.mxu0 %v368
        %414 = vmatprep.subr.mxu0 %v371
        %415 = vmatpush1.msra.mxu0 %v370
        %416 = vmatprep.subr.mxu0 %v373
        %417 = vmatpush1.msra.mxu0 %v372
        %418 = vmatprep.subr.mxu0 %v375
        %419 = vmatpush1.msra.mxu0 %v374
        %420 = vmatprep.subr.mxu0 %v377
        %421 = vmatpush1.msra.mxu0 %v376
        %422 = vmatprep.subr.mxu0 %v379
        %423 = vmatpush1.msra.mxu0 %v378
        %424 = vmatprep.subr.mxu0 %v381
        %425 = vmatpush1.msra.mxu0 %v380
        %426 = vmatprep.subr.mxu0 %v383
        %427 = vmatpush1.msra.mxu0 %v382
        %428 = vmatprep.subr.mxu0 %v385
        %429 = vmatpush1.msra.mxu0 %v384
        %430 = vmatprep.subr.mxu0 %v387
        %431 = vmatpush1.msra.mxu0 %v386
        %432 = vmatprep.subr.mxu0 0.0
        %433 = vmatpush1.msra.mxu0 0.0
        %434 = vmatprep.subr.mxu0 0.0
        %435 = vmatpush1.msra.mxu0 0.0
        %436 = vmatprep.subr.mxu0 0.0
        %437 = vmatpush1.msra.mxu0 0.0
        %438 = vmatprep.subr.mxu0 0.0
        %439 = vmatpush1.msra.mxu0 0.0
        %440 = vmatprep.subr.mxu0 0.0
        %441 = vmatpush1.msra.mxu0 0.0
        %442 = vmatprep.subr.mxu0 0.0
        %443 = vmatpush1.msra.mxu0 0.0
        %444 = vmatprep.subr.mxu0 0.0
        %445 = vmatpush1.msra.mxu0 0.0
        %446 = vmatprep.subr.mxu0 0.0
        %447 = vmatpush1.msra.mxu0 0.0
        %448 = vmatprep.subr.mxu0 0.0
        %449 = vmatpush1.msra.mxu0 0.0
        %450 = vmatprep.subr.mxu0 0.0
        %451 = vmatpush1.msra.mxu0 0.0
        %452 = vmatprep.subr.mxu0 0.0
        %453 = vmatpush1.msra.mxu0 0.0
        %454 = vmatprep.subr.mxu0 0.0
        %455 = vmatpush1.msra.mxu0 0.0
        %456 = vmatprep.subr.mxu0 0.0
        %457 = vmatpush1.msra.mxu0 0.0
        %458 = vmatprep.subr.mxu0 0.0
        %459 = vmatpush1.msra.mxu0 0.0
        %460 = vmatprep.subr.mxu0 0.0
        %461 = vmatpush1.msra.mxu0 0.0
        %462 = vmatprep.subr.mxu0 0.0
        %463 = vmatpush1.msra.mxu0 0.0
        %464 = vmatprep.mubr.f32.mxu0 0.0
        %465 = vmatmul.mubr.f32.gmra.mrb[0].mxu0 %v343
        %v466 = vpop.f32.mrb[0].mxu0
        %v467 = vadd.f32 %v393, %v466
        %v468 = vpop.f32.mrb[0].mxu0
        %v469 = vadd.f32 %v397, %v468
        %470 = vmatprep.mubr.f32.mxu0 0.0
        %471 = vmatmul.mubr.f32.gmra.mrb[0].mxu0 %v344
        %v472 = vpop.f32.mrb[0].mxu0
        %v473 = vadd.f32 %v393, %v472
        %v474 = vpop.f32.mrb[0].mxu0
        %v475 = vadd.f32 %v397, %v474
        %476 = vmatprep.mubr.f32.mxu0 0.0
        %477 = vmatmul.mubr.f32.gmra.mrb[0].mxu0 %v345
        %v478 = vpop.f32.mrb[0].mxu0
        %v479 = vadd.f32 %v393, %v478
        %v480 = vpop.f32.mrb[0].mxu0
        %v481 = vadd.f32 %v397, %v480
        %482 = vmatprep.mubr.f32.mxu0 0.0
        %483 = vmatmul.mubr.f32.gmra.mrb[0].mxu0 %v346
        %v484 = vpop.f32.mrb[0].mxu0
        %v485 = vadd.f32 %v393, %v484
        %v486 = vpop.f32.mrb[0].mxu0
        %v487 = vadd.f32 %v397, %v486
        %488 = vmatprep.mubr.f32.mxu0 0.0
        %489 = vmatmul.mubr.f32.gmra.mrb[0].mxu0 %v347
        %v490 = vpop.f32.mrb[0].mxu0
        %v491 = vadd.f32 %v393, %v490
        %v492 = vpop.f32.mrb[0].mxu0
        %v493 = vadd.f32 %v397, %v492
        %494 = vmatprep.mubr.f32.mxu0 0.0
        %495 = vmatmul.mubr.f32.gmra.mrb[0].mxu0 %v348
        %v496 = vpop.f32.mrb[0].mxu0
        %v497 = vadd.f32 %v393, %v496
        %v498 = vpop.f32.mrb[0].mxu0
        %v499 = vadd.f32 %v397, %v498
        %500 = vmatprep.mubr.f32.mxu0 0.0
        %501 = vmatmul.mubr.f32.gmra.mrb[0].mxu0 %v349
        %v502 = vpop.f32.mrb[0].mxu0
        %v503 = vadd.f32 %v393, %v502
        %v504 = vpop.f32.mrb[0].mxu0
        %v505 = vadd.f32 %v397, %v504
        %506 = vmatprep.mubr.f32.mxu0 0.0
        %507 = vmatmul.mubr.f32.gmra.mrb[0].mxu0 %v350
        %v508 = vpop.f32.mrb[0].mxu0
        %v509 = vadd.f32 %v393, %v508
        %v510 = vpop.f32.mrb[0].mxu0
        %v511 = vadd.f32 %v397, %v510
        %512 = vmatprep.mubr.f32.mxu0 0.0
        %513 = vmatmul.mubr.f32.gmra.mrb[0].mxu0 %v351
        %v514 = vpop.f32.mrb[0].mxu0
        %v515 = vadd.f32 %v393, %v514
        %v516 = vpop.f32.mrb[0].mxu0
        %v517 = vadd.f32 %v397, %v516
        %518 = vmatprep.mubr.f32.mxu0 0.0
        %519 = vmatmul.mubr.f32.gmra.mrb[0].mxu0 %v352
        %v520 = vpop.f32.mrb[0].mxu0
        %v521 = vadd.f32 %v393, %v520
        %v522 = vpop.f32.mrb[0].mxu0
        %v523 = vadd.f32 %v397, %v522
        %524 = vmatprep.mubr.f32.mxu0 0.0
        %525 = vmatmul.mubr.f32.gmra.mrb[0].mxu0 %v353
        %v526 = vpop.f32.mrb[0].mxu0
        %v527 = vadd.f32 %v393, %v526
        %v528 = vpop.f32.mrb[0].mxu0
        %v529 = vadd.f32 %v397, %v528
        %530 = vmatprep.mubr.f32.mxu0 0.0
        %531 = vmatmul.mubr.f32.gmra.mrb[0].mxu0 %v354
        %v532 = vpop.f32.mrb[0].mxu0
        %v533 = vadd.f32 %v393, %v532
        %v534 = vpop.f32.mrb[0].mxu0
        %v535 = vadd.f32 %v397, %v534
        %536 = vmatprep.mubr.f32.mxu0 0.0
        %537 = vmatmul.mubr.f32.gmra.mrb[0].mxu0 %v355
        %v538 = vpop.f32.mrb[0].mxu0
        %v539 = vadd.f32 %v393, %v538
        %v540 = vpop.f32.mrb[0].mxu0
        %v541 = vadd.f32 %v397, %v540
        %542 = vdwg.mxu0
        %v543 = vmul.f32 %v467, 0.5
        %v544 = vmul.f32 %v469, 0.5
        %v545 = vmul.f32 %v473, 0.5
        %v546 = vmul.f32 %v475, 0.5
        %v547 = vmul.f32 %v479, 0.5
        %v548 = vmul.f32 %v481, 0.5
        %v549 = vmul.f32 %v485, 0.5
        %v550 = vmul.f32 %v487, 0.5
        %v551 = vmul.f32 %v491, 0.5
        %v552 = vmul.f32 %v493, 0.5
        %v553 = vmul.f32 %v497, 0.5
        %v554 = vmul.f32 %v499, 0.5
        %v555 = vmul.f32 %v503, 0.5
        %v556 = vmul.f32 %v505, 0.5
        %v557 = vmul.f32 %v509, 0.5
        %v558 = vmul.f32 %v511, 0.5
        %v559 = vmul.f32 %v515, 0.5
        %v560 = vmul.f32 %v517, 0.5
        %v561 = vmul.f32 %v521, 0.5
        %v562 = vmul.f32 %v523, 0.5
        %v563 = vmul.f32 %v527, 0.5
        %v564 = vmul.f32 %v529, 0.5
        %v565 = vmul.f32 %v533, 0.5
        %v566 = vmul.f32 %v535, 0.5
        %v567 = vmul.f32 %v539, 0.5
        %v568 = vmul.f32 %v541, 0.5
        %v569 = vmul.f32 %v467, 0.70710677
        %v570 = vmul.f32 %v469, 0.70710677
        %v571 = vmul.f32 %v473, 0.70710677
        %v572 = vmul.f32 %v475, 0.70710677
        %v573 = vmul.f32 %v479, 0.70710677
        %v574 = vmul.f32 %v481, 0.70710677
        %v575 = vmul.f32 %v485, 0.70710677
        %v576 = vmul.f32 %v487, 0.70710677
        %v577 = vmul.f32 %v491, 0.70710677
        %v578 = vmul.f32 %v493, 0.70710677
        %v579 = vmul.f32 %v497, 0.70710677
        %v580 = vmul.f32 %v499, 0.70710677
        %v581 = vmul.f32 %v503, 0.70710677
        %v582 = vmul.f32 %v505, 0.70710677
        %v583 = vmul.f32 %v509, 0.70710677
        %v584 = vmul.f32 %v511, 0.70710677
        %v585 = vmul.f32 %v515, 0.70710677
        %v586 = vmul.f32 %v517, 0.70710677
        %v587 = vmul.f32 %v521, 0.70710677
        %v588 = vmul.f32 %v523, 0.70710677
        %v589 = vmul.f32 %v527, 0.70710677
        %v590 = vmul.f32 %v529, 0.70710677
        %v591 = vmul.f32 %v533, 0.70710677
        %v592 = vmul.f32 %v535, 0.70710677
        %v593 = vmul.f32 %v539, 0.70710677
        %v594 = vmul.f32 %v541, 0.70710677
        %v595 = verf.f32.pop %v569
        %v596 = verf.f32.pop %v570
        %v597 = verf.f32.pop %v571
        %v598 = verf.f32.pop %v572
        %v599 = verf.f32.pop %v573
        %v600 = verf.f32.pop %v574
        %v601 = verf.f32.pop %v575
        %v602 = verf.f32.pop %v576
        %v603 = verf.f32.pop %v577
        %v604 = verf.f32.pop %v578
        %v605 = verf.f32.pop %v579
        %v606 = verf.f32.pop %v580
        %v607 = verf.f32.pop %v581
        %v608 = verf.f32.pop %v582
        %v609 = verf.f32.pop %v583
        %v610 = verf.f32.pop %v584
        %v611 = verf.f32.pop %v585
        %v612 = verf.f32.pop %v586
        %v613 = verf.f32.pop %v587
        %v614 = verf.f32.pop %v588
        %v615 = verf.f32.pop %v589
        %v616 = verf.f32.pop %v590
        %v617 = verf.f32.pop %v591
        %v618 = verf.f32.pop %v592
        %v619 = verf.f32.pop %v593
        %v620 = verf.f32.pop %v594
        %v621 = vadd.f32 %v595, 1.0
        %v622 = vadd.f32 %v596, 1.0
        %v623 = vadd.f32 %v597, 1.0
        %v624 = vadd.f32 %v598, 1.0
        %v625 = vadd.f32 %v599, 1.0
        %v626 = vadd.f32 %v600, 1.0
        %v627 = vadd.f32 %v601, 1.0
        %v628 = vadd.f32 %v602, 1.0
        %v629 = vadd.f32 %v603, 1.0
        %v630 = vadd.f32 %v604, 1.0
        %v631 = vadd.f32 %v605, 1.0
        %v632 = vadd.f32 %v606, 1.0
        %v633 = vadd.f32 %v607, 1.0
        %v634 = vadd.f32 %v608, 1.0
        %v635 = vadd.f32 %v609, 1.0
        %v636 = vadd.f32 %v610, 1.0
        %v637 = vadd.f32 %v611, 1.0
        %v638 = vadd.f32 %v612, 1.0
        %v639 = vadd.f32 %v613, 1.0
        %v640 = vadd.f32 %v614, 1.0
        %v641 = vadd.f32 %v615, 1.0
        %v642 = vadd.f32 %v616, 1.0
        %v643 = vadd.f32 %v617, 1.0
        %v644 = vadd.f32 %v618, 1.0
        %v645 = vadd.f32 %v619, 1.0
        %v646 = vadd.f32 %v620, 1.0
        %v647 = vmul.f32 %v543, %v621
        %v648 = vmul.f32 %v544, %v622
        %v649 = vmul.f32 %v545, %v623
        %v650 = vmul.f32 %v546, %v624
        %v651 = vmul.f32 %v547, %v625
        %v652 = vmul.f32 %v548, %v626
        %v653 = vmul.f32 %v549, %v627
        %v654 = vmul.f32 %v550, %v628
        %v655 = vmul.f32 %v551, %v629
        %v656 = vmul.f32 %v552, %v630
        %v657 = vmul.f32 %v553, %v631
        %v658 = vmul.f32 %v554, %v632
        %v659 = vmul.f32 %v555, %v633
        %v660 = vmul.f32 %v556, %v634
        %v661 = vmul.f32 %v557, %v635
        %v662 = vmul.f32 %v558, %v636
        %v663 = vmul.f32 %v559, %v637
        %v664 = vmul.f32 %v560, %v638
        %v665 = vmul.f32 %v561, %v639
        %v666 = vmul.f32 %v562, %v640
        %v667 = vmul.f32 %v563, %v641
        %v668 = vmul.f32 %v564, %v642
        %v669 = vmul.f32 %v565, %v643
        %v670 = vmul.f32 %v566, %v644
        %v671 = vmul.f32 %v567, %v645
        %v672 = vmul.f32 %v568, %v646
        %v673 = vld [vmem:[#allocation7] sm:$0xff]
        %v674 = vld [vmem:[#allocation7 + $0x8] sm:$0xff]
        %v675 = vld [vmem:[#allocation7 + $0x10] sm:$0xff]
        %v676 = vld [vmem:[#allocation7 + $0x18] sm:$0xff]
        %v677 = vld [vmem:[#allocation7 + $0x20] sm:$0xff]
        %v678 = vld [vmem:[#allocation7 + $0x28] sm:$0xff]
        %v679 = vld [vmem:[#allocation7 + $0x30] sm:$0xff]
        %v680 = vld [vmem:[#allocation7 + $0x38] sm:$0xff]
        %v681 = vld [vmem:[#allocation7 + $0x40] sm:$0xff]
        %v682 = vld [vmem:[#allocation7 + $0x48] sm:$0xff]
        %v683 = vld [vmem:[#allocation7 + $0x50] sm:$0xff]
        %v684 = vld [vmem:[#allocation7 + $0x58] sm:$0xff]
        %v685 = vld [vmem:[#allocation7 + $0x60] sm:$0xff]
        %v686 = vld [vmem:[#allocation7 + $0x68] sm:$0xff]
        %v687 = vld [vmem:[#allocation7 + $0x70] sm:$0xff]
        %v688 = vld [vmem:[#allocation7 + $0x78] sm:$0xff]
        %v689 = vld [vmem:[#allocation7 + $0x80] sm:$0xff]
        %v690 = vld [vmem:[#allocation7 + $0x88] sm:$0xff]
        %v691 = vld [vmem:[#allocation7 + $0x90] sm:$0xff]
        %v692 = vld [vmem:[#allocation7 + $0x98] sm:$0xff]
        %v693 = vld [vmem:[#allocation7 + $0xa0] sm:$0xff]
        %v694 = vld [vmem:[#allocation7 + $0xa8] sm:$0xff]
        %v695 = vld [vmem:[#allocation7 + $0xb0] sm:$0xff]
        %v696 = vld [vmem:[#allocation7 + $0xb8] sm:$0xff]
        %v697 = vld [vmem:[#allocation7 + $0xc0] sm:$0xff]
        %v698 = vld [vmem:[#allocation7 + $0xc8] sm:$0xff]
        %v699 = vld [vmem:[#allocation7 + $0xd0] sm:$0xff]
        %v700 = vld [vmem:[#allocation7 + $0xd8] sm:$0xff]
        %v701 = vld [vmem:[#allocation7 + $0xe0] sm:$0xff]
        %v702 = vld [vmem:[#allocation7 + $0xe8] sm:$0xff]
        %v703 = vld [vmem:[#allocation7 + $0xf0] sm:$0xff]
        %v704 = vld [vmem:[#allocation7 + $0xf8] sm:$0xff]
        %v705 = vld [vmem:[#allocation7 + $0x100] sm:$0xff]
        %v706 = vld [vmem:[#allocation7 + $0x108] sm:$0xff]
        %v707 = vld [vmem:[#allocation7 + $0x110] sm:$0xff]
        %v708 = vld [vmem:[#allocation7 + $0x118] sm:$0xff]
        %v709 = vld [vmem:[#allocation7 + $0x120] sm:$0xff]
        %v710 = vld [vmem:[#allocation7 + $0x128] sm:$0xff]
        %v711 = vld [vmem:[#allocation7 + $0x130] sm:$0xff]
        %v712 = vld [vmem:[#allocation7 + $0x138] sm:$0xff]
        %v713 = vld [vmem:[#allocation7 + $0x140] sm:$0xff]
        %v714 = vld [vmem:[#allocation7 + $0x148] sm:$0xff]
        %v715 = vld [vmem:[#allocation7 + $0x150] sm:$0xff]
        %v716 = vld [vmem:[#allocation7 + $0x158] sm:$0xff]
        %v717 = vld [vmem:[#allocation7 + $0x160] sm:$0xff]
        %v718 = vld [vmem:[#allocation7 + $0x168] sm:$0xff]
        %v719 = vld [vmem:[#allocation7 + $0x170] sm:$0xff]
        %v720 = vld [vmem:[#allocation7 + $0x178] sm:$0xff]
        %v721 = vld [vmem:[#allocation7 + $0x180] sm:$0xff]
        %v722 = vld [vmem:[#allocation7 + $0x188] sm:$0xff]
        %v723 = vld [vmem:[#allocation7 + $0x190] sm:$0xff]
        %v724 = vld [vmem:[#allocation7 + $0x198] sm:$0xff]
        %v725 = vld [vmem:[#allocation7 + $0x1a0] sm:$0xff]
        %v726 = vld [vmem:[#allocation7 + $0x1a8] sm:$0xff]
        %v727 = vld [vmem:[#allocation7 + $0x1b0] sm:$0xff]
        %v728 = vld [vmem:[#allocation7 + $0x1b8] sm:$0xff]
        %v729 = vld [vmem:[#allocation7 + $0x1c0] sm:$0xff]
        %v730 = vld [vmem:[#allocation7 + $0x1c8] sm:$0xff]
        %v731 = vld [vmem:[#allocation7 + $0x1d0] sm:$0xff]
        %v732 = vld [vmem:[#allocation7 + $0x1d8] sm:$0xff]
        %v733 = vld [vmem:[#allocation7 + $0x1e0] sm:$0xff]
        %v734 = vld [vmem:[#allocation7 + $0x1e8] sm:$0xff]
        %v735 = vld [vmem:[#allocation7 + $0x1f0] sm:$0xff]
        %v736 = vld [vmem:[#allocation7 + $0x1f8] sm:$0xff]
        %v737 = vld [vmem:[%s4] sm:$0x3]
        %v739 = vlaneseq
        %v740 = vshrl.u32 %v739, 7
        %v741 = vsub.s32 0, %v740
        %v742 = vrot.slane %v737, %v741
        %v743 = vlaneseq
        %v744 = vshrl.u32 %v743, 7
        %v745 = vsub.s32 1, %v744
        %v746 = vrot.slane %v737, %v745
        %749 = vmatprep.subr.mxu0 %v674
        %750 = vmatpush1.msra.mxu0 %v673
        %751 = vmatprep.subr.mxu0 %v676
        %752 = vmatpush1.msra.mxu0 %v675
        %753 = vmatprep.subr.mxu0 %v678
        %754 = vmatpush1.msra.mxu0 %v677
        %755 = vmatprep.subr.mxu0 %v680
        %756 = vmatpush1.msra.mxu0 %v679
        %757 = vmatprep.subr.mxu0 %v682
        %758 = vmatpush1.msra.mxu0 %v681
        %759 = vmatprep.subr.mxu0 %v684
        %760 = vmatpush1.msra.mxu0 %v683
        %761 = vmatprep.subr.mxu0 %v686
        %762 = vmatpush1.msra.mxu0 %v685
        %763 = vmatprep.subr.mxu0 %v688
        %764 = vmatpush1.msra.mxu0 %v687
        %765 = vmatprep.subr.mxu0 %v690
        %766 = vmatpush1.msra.mxu0 %v689
        %767 = vmatprep.subr.mxu0 %v692
        %768 = vmatpush1.msra.mxu0 %v691
        %769 = vmatprep.subr.mxu0 %v694
        %770 = vmatpush1.msra.mxu0 %v693
        %771 = vmatprep.subr.mxu0 %v696
        %772 = vmatpush1.msra.mxu0 %v695
        %773 = vmatprep.subr.mxu0 %v698
        %774 = vmatpush1.msra.mxu0 %v697
        %775 = vmatprep.subr.mxu0 %v700
        %776 = vmatpush1.msra.mxu0 %v699
        %777 = vmatprep.subr.mxu0 %v702
        %778 = vmatpush1.msra.mxu0 %v701
        %779 = vmatprep.subr.mxu0 %v704
        %780 = vmatpush1.msra.mxu0 %v703
        %781 = vmatprep.subr.mxu0 %v706
        %782 = vmatpush1.msra.mxu0 %v705
        %783 = vmatprep.subr.mxu0 %v708
        %784 = vmatpush1.msra.mxu0 %v707
        %785 = vmatprep.subr.mxu0 %v710
        %786 = vmatpush1.msra.mxu0 %v709
        %787 = vmatprep.subr.mxu0 %v712
        %788 = vmatpush1.msra.mxu0 %v711
        %789 = vmatprep.subr.mxu0 %v714
        %790 = vmatpush1.msra.mxu0 %v713
        %791 = vmatprep.subr.mxu0 %v716
        %792 = vmatpush1.msra.mxu0 %v715
        %793 = vmatprep.subr.mxu0 %v718
        %794 = vmatpush1.msra.mxu0 %v717
        %795 = vmatprep.subr.mxu0 %v720
        %796 = vmatpush1.msra.mxu0 %v719
        %797 = vmatprep.subr.mxu0 %v722
        %798 = vmatpush1.msra.mxu0 %v721
        %799 = vmatprep.subr.mxu0 %v724
        %800 = vmatpush1.msra.mxu0 %v723
        %801 = vmatprep.subr.mxu0 %v726
        %802 = vmatpush1.msra.mxu0 %v725
        %803 = vmatprep.subr.mxu0 %v728
        %804 = vmatpush1.msra.mxu0 %v727
        %805 = vmatprep.subr.mxu0 %v730
        %806 = vmatpush1.msra.mxu0 %v729
        %807 = vmatprep.subr.mxu0 %v732
        %808 = vmatpush1.msra.mxu0 %v731
        %809 = vmatprep.subr.mxu0 %v734
        %810 = vmatpush1.msra.mxu0 %v733
        %811 = vmatprep.subr.mxu0 %v736
        %812 = vmatpush1.msra.mxu0 %v735
        %813 = vmatprep.mubr.f32.mxu0 %v648
        %814 = vmatmul.mubr.f32.gmra.mrb[0].mxu0 %v647
        %v815 = vpop.f32.mrb[0].mxu0
        %v816 = vadd.f32 %v742, %v815
        %v817 = vpop.f32.mrb[0].mxu0
        %v818 = vadd.f32 %v746, %v817
        %819 = vmatprep.mubr.f32.mxu0 %v650
        %820 = vmatmul.mubr.f32.gmra.mrb[0].mxu0 %v649
        %v821 = vpop.f32.mrb[0].mxu0
        %v822 = vadd.f32 %v742, %v821
        %v823 = vpop.f32.mrb[0].mxu0
        %v824 = vadd.f32 %v746, %v823
        %825 = vmatprep.mubr.f32.mxu0 %v652
        %826 = vmatmul.mubr.f32.gmra.mrb[0].mxu0 %v651
        %v827 = vpop.f32.mrb[0].mxu0
        %v828 = vadd.f32 %v742, %v827
        %v829 = vpop.f32.mrb[0].mxu0
        %v830 = vadd.f32 %v746, %v829
        %831 = vmatprep.mubr.f32.mxu0 %v654
        %832 = vmatmul.mubr.f32.gmra.mrb[0].mxu0 %v653
        %v833 = vpop.f32.mrb[0].mxu0
        %v834 = vadd.f32 %v742, %v833
        %v835 = vpop.f32.mrb[0].mxu0
        %v836 = vadd.f32 %v746, %v835
        %837 = vmatprep.mubr.f32.mxu0 %v656
        %838 = vmatmul.mubr.f32.gmra.mrb[0].mxu0 %v655
        %v839 = vpop.f32.mrb[0].mxu0
        %v840 = vadd.f32 %v742, %v839
        %v841 = vpop.f32.mrb[0].mxu0
        %v842 = vadd.f32 %v746, %v841
        %843 = vmatprep.mubr.f32.mxu0 %v658
        %844 = vmatmul.mubr.f32.gmra.mrb[0].mxu0 %v657
        %v845 = vpop.f32.mrb[0].mxu0
        %v846 = vadd.f32 %v742, %v845
        %v847 = vpop.f32.mrb[0].mxu0
        %v848 = vadd.f32 %v746, %v847
        %849 = vmatprep.mubr.f32.mxu0 %v660
        %850 = vmatmul.mubr.f32.gmra.mrb[0].mxu0 %v659
        %v851 = vpop.f32.mrb[0].mxu0
        %v852 = vadd.f32 %v742, %v851
        %v853 = vpop.f32.mrb[0].mxu0
        %v854 = vadd.f32 %v746, %v853
        %855 = vmatprep.mubr.f32.mxu0 %v662
        %856 = vmatmul.mubr.f32.gmra.mrb[0].mxu0 %v661
        %v857 = vpop.f32.mrb[0].mxu0
        %v858 = vadd.f32 %v742, %v857
        %v859 = vpop.f32.mrb[0].mxu0
        %v860 = vadd.f32 %v746, %v859
        %861 = vmatprep.mubr.f32.mxu0 %v664
        %862 = vmatmul.mubr.f32.gmra.mrb[0].mxu0 %v663
        %v863 = vpop.f32.mrb[0].mxu0
        %v864 = vadd.f32 %v742, %v863
        %v865 = vpop.f32.mrb[0].mxu0
        %v866 = vadd.f32 %v746, %v865
        %867 = vmatprep.mubr.f32.mxu0 %v666
        %868 = vmatmul.mubr.f32.gmra.mrb[0].mxu0 %v665
        %v869 = vpop.f32.mrb[0].mxu0
        %v870 = vadd.f32 %v742, %v869
        %v871 = vpop.f32.mrb[0].mxu0
        %v872 = vadd.f32 %v746, %v871
        %873 = vmatprep.mubr.f32.mxu0 %v668
        %874 = vmatmul.mubr.f32.gmra.mrb[0].mxu0 %v667
        %v875 = vpop.f32.mrb[0].mxu0
        %v876 = vadd.f32 %v742, %v875
        %v877 = vpop.f32.mrb[0].mxu0
        %v878 = vadd.f32 %v746, %v877
        %879 = vmatprep.mubr.f32.mxu0 %v670
        %880 = vmatmul.mubr.f32.gmra.mrb[0].mxu0 %v669
        %v881 = vpop.f32.mrb[0].mxu0
        %v882 = vadd.f32 %v742, %v881
        %v883 = vpop.f32.mrb[0].mxu0
        %v884 = vadd.f32 %v746, %v883
        %885 = vmatprep.mubr.f32.mxu0 %v672
        %886 = vmatmul.mubr.f32.gmra.mrb[0].mxu0 %v671
        %v887 = vpop.f32.mrb[0].mxu0
        %v888 = vadd.f32 %v742, %v887
        %v889 = vpop.f32.mrb[0].mxu0
        %v890 = vadd.f32 %v746, %v889
        %891 = vdwg.mxu0
        %v892 = vmul.f32 %v816, 0.5
        %v893 = vmul.f32 %v818, 0.5
        %v894 = vmul.f32 %v822, 0.5
        %v895 = vmul.f32 %v824, 0.5
        %v896 = vmul.f32 %v828, 0.5
        %v897 = vmul.f32 %v830, 0.5
        %v898 = vmul.f32 %v834, 0.5
        %v899 = vmul.f32 %v836, 0.5
        %v900 = vmul.f32 %v840, 0.5
        %v901 = vmul.f32 %v842, 0.5
        %v902 = vmul.f32 %v846, 0.5
        %v903 = vmul.f32 %v848, 0.5
        %v904 = vmul.f32 %v852, 0.5
        %v905 = vmul.f32 %v854, 0.5
        %v906 = vmul.f32 %v858, 0.5
        %v907 = vmul.f32 %v860, 0.5
        %v908 = vmul.f32 %v864, 0.5
        %v909 = vmul.f32 %v866, 0.5
        %v910 = vmul.f32 %v870, 0.5
        %v911 = vmul.f32 %v872, 0.5
        %v912 = vmul.f32 %v876, 0.5
        %v913 = vmul.f32 %v878, 0.5
        %v914 = vmul.f32 %v882, 0.5
        %v915 = vmul.f32 %v884, 0.5
        %v916 = vmul.f32 %v888, 0.5
        %v917 = vmul.f32 %v890, 0.5
        %v918 = vmul.f32 %v816, 0.70710677
        %v919 = vmul.f32 %v818, 0.70710677
        %v920 = vmul.f32 %v822, 0.70710677
        %v921 = vmul.f32 %v824, 0.70710677
        %v922 = vmul.f32 %v828, 0.70710677
        %v923 = vmul.f32 %v830, 0.70710677
        %v924 = vmul.f32 %v834, 0.70710677
        %v925 = vmul.f32 %v836, 0.70710677
        %v926 = vmul.f32 %v840, 0.70710677
        %v927 = vmul.f32 %v842, 0.70710677
        %v928 = vmul.f32 %v846, 0.70710677
        %v929 = vmul.f32 %v848, 0.70710677
        %v930 = vmul.f32 %v852, 0.70710677
        %v931 = vmul.f32 %v854, 0.70710677
        %v932 = vmul.f32 %v858, 0.70710677
        %v933 = vmul.f32 %v860, 0.70710677
        %v934 = vmul.f32 %v864, 0.70710677
        %v935 = vmul.f32 %v866, 0.70710677
        %v936 = vmul.f32 %v870, 0.70710677
        %v937 = vmul.f32 %v872, 0.70710677
        %v938 = vmul.f32 %v876, 0.70710677
        %v939 = vmul.f32 %v878, 0.70710677
        %v940 = vmul.f32 %v882, 0.70710677
        %v941 = vmul.f32 %v884, 0.70710677
        %v942 = vmul.f32 %v888, 0.70710677
        %v943 = vmul.f32 %v890, 0.70710677
        %v944 = verf.f32.pop %v918
        %v945 = verf.f32.pop %v919
        %v946 = verf.f32.pop %v920
        %v947 = verf.f32.pop %v921
        %v948 = verf.f32.pop %v922
        %v949 = verf.f32.pop %v923
        %v950 = verf.f32.pop %v924
        %v951 = verf.f32.pop %v925
        %v952 = verf.f32.pop %v926
        %v953 = verf.f32.pop %v927
        %v954 = verf.f32.pop %v928
        %v955 = verf.f32.pop %v929
        %v956 = verf.f32.pop %v930
        %v957 = verf.f32.pop %v931
        %v958 = verf.f32.pop %v932
        %v959 = verf.f32.pop %v933
        %v960 = verf.f32.pop %v934
        %v961 = verf.f32.pop %v935
        %v962 = verf.f32.pop %v936
        %v963 = verf.f32.pop %v937
        %v964 = verf.f32.pop %v938
        %v965 = verf.f32.pop %v939
        %v966 = verf.f32.pop %v940
        %v967 = verf.f32.pop %v941
        %v968 = verf.f32.pop %v942
        %v969 = verf.f32.pop %v943
        %v970 = vadd.f32 %v944, 1.0
        %v971 = vadd.f32 %v945, 1.0
        %v972 = vadd.f32 %v946, 1.0
        %v973 = vadd.f32 %v947, 1.0
        %v974 = vadd.f32 %v948, 1.0
        %v975 = vadd.f32 %v949, 1.0
        %v976 = vadd.f32 %v950, 1.0
        %v977 = vadd.f32 %v951, 1.0
        %v978 = vadd.f32 %v952, 1.0
        %v979 = vadd.f32 %v953, 1.0
        %v980 = vadd.f32 %v954, 1.0
        %v981 = vadd.f32 %v955, 1.0
        %v982 = vadd.f32 %v956, 1.0
        %v983 = vadd.f32 %v957, 1.0
        %v984 = vadd.f32 %v958, 1.0
        %v985 = vadd.f32 %v959, 1.0
        %v986 = vadd.f32 %v960, 1.0
        %v987 = vadd.f32 %v961, 1.0
        %v988 = vadd.f32 %v962, 1.0
        %v989 = vadd.f32 %v963, 1.0
        %v990 = vadd.f32 %v964, 1.0
        %v991 = vadd.f32 %v965, 1.0
        %v992 = vadd.f32 %v966, 1.0
        %v993 = vadd.f32 %v967, 1.0
        %v994 = vadd.f32 %v968, 1.0
        %v995 = vadd.f32 %v969, 1.0
        %v996 = vmul.f32 %v892, %v970
        %v997 = vmul.f32 %v893, %v971
        %v998 = vmul.f32 %v894, %v972
        %v999 = vmul.f32 %v895, %v973
        %v1000 = vmul.f32 %v896, %v974
        %v1001 = vmul.f32 %v897, %v975
        %v1002 = vmul.f32 %v898, %v976
        %v1003 = vmul.f32 %v899, %v977
        %v1004 = vmul.f32 %v900, %v978
        %v1005 = vmul.f32 %v901, %v979
        %v1006 = vmul.f32 %v902, %v980
        %v1007 = vmul.f32 %v903, %v981
        %v1008 = vmul.f32 %v904, %v982
        %v1009 = vmul.f32 %v905, %v983
        %v1010 = vmul.f32 %v906, %v984
        %v1011 = vmul.f32 %v907, %v985
        %v1012 = vmul.f32 %v908, %v986
        %v1013 = vmul.f32 %v909, %v987
        %v1014 = vmul.f32 %v910, %v988
        %v1015 = vmul.f32 %v911, %v989
        %v1016 = vmul.f32 %v912, %v990
        %v1017 = vmul.f32 %v913, %v991
        %v1018 = vmul.f32 %v914, %v992
        %v1019 = vmul.f32 %v915, %v993
        %v1020 = vmul.f32 %v916, %v994
        %v1021 = vmul.f32 %v917, %v995
        %v1022 = vmul.f32 %v996, %v996
        %v1023 = vmul.f32 %v997, %v997
        %v1024 = vmul.f32 %v998, %v998
        %v1025 = vmul.f32 %v999, %v999
        %v1026 = vmul.f32 %v1000, %v1000
        %v1027 = vmul.f32 %v1001, %v1001
        %v1028 = vmul.f32 %v1002, %v1002
        %v1029 = vmul.f32 %v1003, %v1003
        %v1030 = vmul.f32 %v1004, %v1004
        %v1031 = vmul.f32 %v1005, %v1005
        %v1032 = vmul.f32 %v1006, %v1006
        %v1033 = vmul.f32 %v1007, %v1007
        %v1034 = vmul.f32 %v1008, %v1008
        %v1035 = vmul.f32 %v1009, %v1009
        %v1036 = vmul.f32 %v1010, %v1010
        %v1037 = vmul.f32 %v1011, %v1011
        %v1038 = vmul.f32 %v1012, %v1012
        %v1039 = vmul.f32 %v1013, %v1013
        %v1040 = vmul.f32 %v1014, %v1014
        %v1041 = vmul.f32 %v1015, %v1015
        %v1042 = vmul.f32 %v1016, %v1016
        %v1043 = vmul.f32 %v1017, %v1017
        %v1044 = vmul.f32 %v1018, %v1018
        %v1045 = vmul.f32 %v1019, %v1019
        %v1046 = vmul.f32 %v1020, %v1020
        %v1047 = vmul.f32 %v1021, %v1021
        %v1048 = vadd.f32 %v1022, %v1023
        %1049 = vadd.xlane.f32.xlu0 %v1048
        %v1050 = vpop.xlane.xlu0 %1049
        %v1051 = vadd.f32 %v1024, %v1025
        %1052 = vadd.xlane.f32.xlu0 %v1051
        %v1053 = vpop.xlane.xlu0 %1052
        %v1054 = vadd.f32 %v1026, %v1027
        %1055 = vadd.xlane.f32.xlu0 %v1054
        %v1056 = vpop.xlane.xlu0 %1055
        %v1057 = vadd.f32 %v1028, %v1029
        %1058 = vadd.xlane.f32.xlu0 %v1057
        %v1059 = vpop.xlane.xlu0 %1058
        %v1060 = vadd.f32 %v1030, %v1031
        %1061 = vadd.xlane.f32.xlu0 %v1060
        %v1062 = vpop.xlane.xlu0 %1061
        %v1063 = vadd.f32 %v1032, %v1033
        %1064 = vadd.xlane.f32.xlu0 %v1063
        %v1065 = vpop.xlane.xlu0 %1064
        %v1066 = vadd.f32 %v1034, %v1035
        %1067 = vadd.xlane.f32.xlu0 %v1066
        %v1068 = vpop.xlane.xlu0 %1067
        %v1069 = vadd.f32 %v1036, %v1037
        %1070 = vadd.xlane.f32.xlu0 %v1069
        %v1071 = vpop.xlane.xlu0 %1070
        %v1072 = vadd.f32 %v1038, %v1039
        %1073 = vadd.xlane.f32.xlu0 %v1072
        %v1074 = vpop.xlane.xlu0 %1073
        %v1075 = vadd.f32 %v1040, %v1041
        %1076 = vadd.xlane.f32.xlu0 %v1075
        %v1077 = vpop.xlane.xlu0 %1076
        %v1078 = vadd.f32 %v1042, %v1043
        %1079 = vadd.xlane.f32.xlu0 %v1078
        %v1080 = vpop.xlane.xlu0 %1079
        %v1081 = vadd.f32 %v1044, %v1045
        %1082 = vadd.xlane.f32.xlu0 %v1081
        %v1083 = vpop.xlane.xlu0 %1082
        %v1084 = vadd.f32 %v1046, %v1047
        %1085 = vadd.xlane.f32.xlu0 %v1084
        %v1086 = vpop.xlane.xlu0 %1085
        %v1087 = vrsqrt.pop %v1050
        %v1088 = vrsqrt.pop %v1053
        %v1089 = vrsqrt.pop %v1056
        %v1090 = vrsqrt.pop %v1059
        %v1091 = vrsqrt.pop %v1062
        %v1092 = vrsqrt.pop %v1065
        %v1093 = vrsqrt.pop %v1068
        %v1094 = vrsqrt.pop %v1071
        %v1095 = vrsqrt.pop %v1074
        %v1096 = vrsqrt.pop %v1077
        %v1097 = vrsqrt.pop %v1080
        %v1098 = vrsqrt.pop %v1083
        %v1099 = vrsqrt.pop %v1086
        %v1100 = vmin.f32 %v1087, 1000000.0
        %v1101 = vmin.f32 %v1088, 1000000.0
        %v1102 = vmin.f32 %v1089, 1000000.0
        %v1103 = vmin.f32 %v1090, 1000000.0
        %v1104 = vmin.f32 %v1091, 1000000.0
        %v1105 = vmin.f32 %v1092, 1000000.0
        %v1106 = vmin.f32 %v1093, 1000000.0
        %v1107 = vmin.f32 %v1094, 1000000.0
        %v1108 = vmin.f32 %v1095, 1000000.0
        %v1109 = vmin.f32 %v1096, 1000000.0
        %v1110 = vmin.f32 %v1097, 1000000.0
        %v1111 = vmin.f32 %v1098, 1000000.0
        %v1112 = vmin.f32 %v1099, 1000000.0
        %v1113 = vmul.f32 %v996, %v1100
        %v1114 = vmul.f32 %v997, %v1100
        %v1115 = vmul.f32 %v998, %v1101
        %v1116 = vmul.f32 %v999, %v1101
        %v1117 = vmul.f32 %v1000, %v1102
        %v1118 = vmul.f32 %v1001, %v1102
        %v1119 = vmul.f32 %v1002, %v1103
        %v1120 = vmul.f32 %v1003, %v1103
        %v1121 = vmul.f32 %v1004, %v1104
        %v1122 = vmul.f32 %v1005, %v1104
        %v1123 = vmul.f32 %v1006, %v1105
        %v1124 = vmul.f32 %v1007, %v1105
        %v1125 = vmul.f32 %v1008, %v1106
        %v1126 = vmul.f32 %v1009, %v1106
        %v1127 = vmul.f32 %v1010, %v1107
        %v1128 = vmul.f32 %v1011, %v1107
        %v1129 = vmul.f32 %v1012, %v1108
        %v1130 = vmul.f32 %v1013, %v1108
        %v1131 = vmul.f32 %v1014, %v1109
        %v1132 = vmul.f32 %v1015, %v1109
        %v1133 = vmul.f32 %v1016, %v1110
        %v1134 = vmul.f32 %v1017, %v1110
        %v1135 = vmul.f32 %v1018, %v1111
        %v1136 = vmul.f32 %v1019, %v1111
        %v1137 = vmul.f32 %v1020, %v1112
        %v1138 = vmul.f32 %v1021, %v1112
        %v1139 = vld [vmem:[#allocation8] sm:$0xff]
        %v1140 = vld [vmem:[#allocation8 + $0x8] sm:$0xff]
        %v1141 = vld [vmem:[#allocation8 + $0x10] sm:$0xff]
        %v1142 = vld [vmem:[#allocation8 + $0x18] sm:$0xff]
        %v1143 = vld [vmem:[#allocation8 + $0x20] sm:$0xff]
        %v1144 = vld [vmem:[#allocation8 + $0x28] sm:$0xff]
        %v1145 = vld [vmem:[#allocation8 + $0x30] sm:$0xff]
        %v1146 = vld [vmem:[#allocation8 + $0x38] sm:$0xff]
        %v1147 = vld [vmem:[#allocation8 + $0x40] sm:$0xff]
        %v1148 = vld [vmem:[#allocation8 + $0x48] sm:$0xff]
        %v1149 = vld [vmem:[#allocation8 + $0x50] sm:$0xff]
        %v1150 = vld [vmem:[#allocation8 + $0x58] sm:$0xff]
        %v1151 = vld [vmem:[#allocation8 + $0x60] sm:$0xff]
        %v1152 = vld [vmem:[#allocation8 + $0x68] sm:$0xff]
        %v1153 = vld [vmem:[#allocation8 + $0x70] sm:$0xff]
        %v1154 = vld [vmem:[#allocation8 + $0x78] sm:$0xff]
        %v1155 = vld [vmem:[#allocation8 + $0x80] sm:$0xff]
        %v1156 = vld [vmem:[#allocation8 + $0x88] sm:$0xff]
        %v1157 = vld [vmem:[#allocation8 + $0x90] sm:$0xff]
        %v1158 = vld [vmem:[#allocation8 + $0x98] sm:$0xff]
        %v1159 = vld [vmem:[#allocation8 + $0xa0] sm:$0xff]
        %v1160 = vld [vmem:[#allocation8 + $0xa8] sm:$0xff]
        %v1161 = vld [vmem:[#allocation8 + $0xb0] sm:$0xff]
        %v1162 = vld [vmem:[#allocation8 + $0xb8] sm:$0xff]
        %v1163 = vld [vmem:[#allocation8 + $0xc0] sm:$0xff]
        %v1164 = vld [vmem:[#allocation8 + $0xc8] sm:$0xff]
        %v1165 = vld [vmem:[#allocation8 + $0xd0] sm:$0xff]
        %v1166 = vld [vmem:[#allocation8 + $0xd8] sm:$0xff]
        %v1167 = vld [vmem:[#allocation8 + $0xe0] sm:$0xff]
        %v1168 = vld [vmem:[#allocation8 + $0xe8] sm:$0xff]
        %v1169 = vld [vmem:[#allocation8 + $0xf0] sm:$0xff]
        %v1170 = vld [vmem:[#allocation8 + $0xf8] sm:$0xff]
        %v1171 = vld [vmem:[%s6] sm:$0x1]
        %v1173 = vlaneseq
        %v1174 = vshrl.u32 %v1173, 7
        %v1175 = vsub.s32 0, %v1174
        %v1176 = vrot.slane %v1171, %v1175
        %1178 = vmatprep.subr.mxu0 0.0
        %1179 = vmatpush1.msra.mxu0 %v1139
        %1180 = vmatprep.subr.mxu0 0.0
        %1181 = vmatpush1.msra.mxu0 %v1140
        %1182 = vmatprep.subr.mxu0 0.0
        %1183 = vmatpush1.msra.mxu0 %v1141
        %1184 = vmatprep.subr.mxu0 0.0
        %1185 = vmatpush1.msra.mxu0 %v1142
        %1186 = vmatprep.subr.mxu0 0.0
        %1187 = vmatpush1.msra.mxu0 %v1143
        %1188 = vmatprep.subr.mxu0 0.0
        %1189 = vmatpush1.msra.mxu0 %v1144
        %1190 = vmatprep.subr.mxu0 0.0
        %1191 = vmatpush1.msra.mxu0 %v1145
        %1192 = vmatprep.subr.mxu0 0.0
        %1193 = vmatpush1.msra.mxu0 %v1146
        %1194 = vmatprep.subr.mxu0 0.0
        %1195 = vmatpush1.msra.mxu0 %v1147
        %1196 = vmatprep.subr.mxu0 0.0
        %1197 = vmatpush1.msra.mxu0 %v1148
        %1198 = vmatprep.subr.mxu0 0.0
        %1199 = vmatpush1.msra.mxu0 %v1149
        %1200 = vmatprep.subr.mxu0 0.0
        %1201 = vmatpush1.msra.mxu0 %v1150
        %1202 = vmatprep.subr.mxu0 0.0
        %1203 = vmatpush1.msra.mxu0 %v1151
        %1204 = vmatprep.subr.mxu0 0.0
        %1205 = vmatpush1.msra.mxu0 %v1152
        %1206 = vmatprep.subr.mxu0 0.0
        %1207 = vmatpush1.msra.mxu0 %v1153
        %1208 = vmatprep.subr.mxu0 0.0
        %1209 = vmatpush1.msra.mxu0 %v1154
        %1210 = vmatprep.subr.mxu0 0.0
        %1211 = vmatpush1.msra.mxu0 %v1155
        %1212 = vmatprep.subr.mxu0 0.0
        %1213 = vmatpush1.msra.mxu0 %v1156
        %1214 = vmatprep.subr.mxu0 0.0
        %1215 = vmatpush1.msra.mxu0 %v1157
        %1216 = vmatprep.subr.mxu0 0.0
        %1217 = vmatpush1.msra.mxu0 %v1158
        %1218 = vmatprep.subr.mxu0 0.0
        %1219 = vmatpush1.msra.mxu0 %v1159
        %1220 = vmatprep.subr.mxu0 0.0
        %1221 = vmatpush1.msra.mxu0 %v1160
        %1222 = vmatprep.subr.mxu0 0.0
        %1223 = vmatpush1.msra.mxu0 %v1161
        %1224 = vmatprep.subr.mxu0 0.0
        %1225 = vmatpush1.msra.mxu0 %v1162
        %1226 = vmatprep.subr.mxu0 0.0
        %1227 = vmatpush1.msra.mxu0 %v1163
        %1228 = vmatprep.subr.mxu0 0.0
        %1229 = vmatpush1.msra.mxu0 %v1164
        %1230 = vmatprep.subr.mxu0 0.0
        %1231 = vmatpush1.msra.mxu0 %v1165
        %1232 = vmatprep.subr.mxu0 0.0
        %1233 = vmatpush1.msra.mxu0 %v1166
        %1234 = vmatprep.subr.mxu0 0.0
        %1235 = vmatpush1.msra.mxu0 %v1167
        %1236 = vmatprep.subr.mxu0 0.0
        %1237 = vmatpush1.msra.mxu0 %v1168
        %1238 = vmatprep.subr.mxu0 0.0
        %1239 = vmatpush1.msra.mxu0 %v1169
        %1240 = vmatprep.subr.mxu0 0.0
        %1241 = vmatpush1.msra.mxu0 %v1170
        %1242 = vmatprep.mubr.f32.mxu0 %v1114
        %1243 = vmatmul.mubr.f32.gmra.mrb[0].mxu0 %v1113
        %v1244 = vpop.f32.mrb[0].mxu0
        %v1245 = vadd.f32 %v1176, %v1244
        %v1246 = vpop.f32.mrb[0].mxu0
        %1247 = vmatprep.mubr.f32.mxu0 %v1116
        %1248 = vmatmul.mubr.f32.gmra.mrb[0].mxu0 %v1115
        %v1249 = vpop.f32.mrb[0].mxu0
        %v1250 = vadd.f32 %v1176, %v1249
        %v1251 = vpop.f32.mrb[0].mxu0
        %1252 = vmatprep.mubr.f32.mxu0 %v1118
        %1253 = vmatmul.mubr.f32.gmra.mrb[0].mxu0 %v1117
        %v1254 = vpop.f32.mrb[0].mxu0
        %v1255 = vadd.f32 %v1176, %v1254
        %v1256 = vpop.f32.mrb[0].mxu0
        %1257 = vmatprep.mubr.f32.mxu0 %v1120
        %1258 = vmatmul.mubr.f32.gmra.mrb[0].mxu0 %v1119
        %v1259 = vpop.f32.mrb[0].mxu0
        %v1260 = vadd.f32 %v1176, %v1259
        %v1261 = vpop.f32.mrb[0].mxu0
        %1262 = vmatprep.mubr.f32.mxu0 %v1122
        %1263 = vmatmul.mubr.f32.gmra.mrb[0].mxu0 %v1121
        %v1264 = vpop.f32.mrb[0].mxu0
        %v1265 = vadd.f32 %v1176, %v1264
        %v1266 = vpop.f32.mrb[0].mxu0
        %1267 = vmatprep.mubr.f32.mxu0 %v1124
        %1268 = vmatmul.mubr.f32.gmra.mrb[0].mxu0 %v1123
        %v1269 = vpop.f32.mrb[0].mxu0
        %v1270 = vadd.f32 %v1176, %v1269
        %v1271 = vpop.f32.mrb[0].mxu0
        %1272 = vmatprep.mubr.f32.mxu0 %v1126
        %1273 = vmatmul.mubr.f32.gmra.mrb[0].mxu0 %v1125
        %v1274 = vpop.f32.mrb[0].mxu0
        %v1275 = vadd.f32 %v1176, %v1274
        %v1276 = vpop.f32.mrb[0].mxu0
        %1277 = vmatprep.mubr.f32.mxu0 %v1128
        %1278 = vmatmul.mubr.f32.gmra.mrb[0].mxu0 %v1127
        %v1279 = vpop.f32.mrb[0].mxu0
        %v1280 = vadd.f32 %v1176, %v1279
        %v1281 = vpop.f32.mrb[0].mxu0
        %1282 = vmatprep.mubr.f32.mxu0 %v1130
        %1283 = vmatmul.mubr.f32.gmra.mrb[0].mxu0 %v1129
        %v1284 = vpop.f32.mrb[0].mxu0
        %v1285 = vadd.f32 %v1176, %v1284
        %v1286 = vpop.f32.mrb[0].mxu0
        %1287 = vmatprep.mubr.f32.mxu0 %v1132
        %1288 = vmatmul.mubr.f32.gmra.mrb[0].mxu0 %v1131
        %v1289 = vpop.f32.mrb[0].mxu0
        %v1290 = vadd.f32 %v1176, %v1289
        %v1291 = vpop.f32.mrb[0].mxu0
        %1292 = vmatprep.mubr.f32.mxu0 %v1134
        %1293 = vmatmul.mubr.f32.gmra.mrb[0].mxu0 %v1133
        %v1294 = vpop.f32.mrb[0].mxu0
        %v1295 = vadd.f32 %v1176, %v1294
        %v1296 = vpop.f32.mrb[0].mxu0
        %1297 = vmatprep.mubr.f32.mxu0 %v1136
        %1298 = vmatmul.mubr.f32.gmra.mrb[0].mxu0 %v1135
        %v1299 = vpop.f32.mrb[0].mxu0
        %v1300 = vadd.f32 %v1176, %v1299
        %v1301 = vpop.f32.mrb[0].mxu0
        %1302 = vmatprep.mubr.f32.mxu0 %v1138
        %1303 = vmatmul.mubr.f32.gmra.mrb[0].mxu0 %v1137
        %v1304 = vpop.f32.mrb[0].mxu0
        %v1305 = vadd.f32 %v1176, %v1304
        %v1306 = vpop.f32.mrb[0].mxu0
        %1307 = vdwg.mxu0
        %1308 = vst [vmem:[%s340] sm:$0xff] %v1245
        %1309 = vst [vmem:[%s340 + $0x8] sm:$0xff] %v1250
        %1310 = vst [vmem:[%s340 + $0x10] sm:$0xff] %v1255
        %1311 = vst [vmem:[%s340 + $0x18] sm:$0xff] %v1260
        %1312 = vst [vmem:[%s340 + $0x20] sm:$0xff] %v1265
        %1313 = vst [vmem:[%s340 + $0x28] sm:$0xff] %v1270
        %1314 = vst [vmem:[%s340 + $0x30] sm:$0xff] %v1275
        %1315 = vst [vmem:[%s340 + $0x38] sm:$0xff] %v1280
        %1316 = vst [vmem:[%s340 + $0x40] sm:$0xff] %v1285
        %1317 = vst [vmem:[%s340 + $0x48] sm:$0xff] %v1290
        %1318 = vst [vmem:[%s340 + $0x50] sm:$0xff] %v1295
        %1319 = vst [vmem:[%s340 + $0x58] sm:$0xff] %v1300
        %1320 = vst [vmem:[%s340 + $0x60] sm:$0xff] %v1305
        %s1321 = sand.u32 %s186, 1
        %s1322 = scalar_lea.sflag [#allocation4], %s1321
        %s1323 = sand.u32 %s186, 1
        %s1324 = smul.addr %s1323, 104
        %s1325 = scalar_lea.vmem [#allocation10], %s1324
        // Predicated region
        $region65: #{tpu_custom_call.1} parent=47 // pred_check
          %p1326 = pneg %p196
        $region66: #{tpu_custom_call.1} parent=47 // pred_check_branch
          %1328 = sbr.rel (%p1326) target = $region68
        $region67: #{tpu_custom_call.1} parent=47 // pred_region
          %s1329 = smul.u32 13, %s26
          %s1331 = ssub.s32 1664, 1664
          %1332 = vsyncadd %s1322, %s1331
          %s1333 = smul.addr %s1329, 128
          %s1334 = scalar_lea.hbm %s7, %s1333
          %s1335 = sshll.u32 %s1325, 4
          %s1336 = int_to_ptr.vmem [resolvable:$true] %s1335
          %1341 = dma.vmem_to_hbm [thread:$0]  %s1336, 1664, %s1334, %s1322, 128, 128, 8
        $region68: #{tpu_custom_call.1} parent=47 // pred_fallthru
          _
      $region48: #{tpu_custom_call.1} parent=5 // pred_fallthru
        _
      %p1342 = scmp.le.s32.totalorder 2, %s21
      // Predicated region
      $region69: #{tpu_custom_call.1} parent=5 // pred_check
        %p1343 = pneg %p1342
      $region70: #{tpu_custom_call.1} parent=5 // pred_check_branch
        %1345 = sbr.rel (%p1343) target = $region72
      $region71: #{tpu_custom_call.1} parent=5 // pred_region
        %s1346 = ssub.s32 %s21, 2
        // Predicated region
        $region73: #{tpu_custom_call.1} parent=71 // pred_check
          %p1347 = pneg %p202
        $region74: #{tpu_custom_call.1} parent=71 // pred_check_branch
          %1349 = sbr.rel (%p1347) target = $region76
        $region75: #{tpu_custom_call.1} parent=71 // pred_region
          %s1350 = sand.u32 %s187, 1
          %s1351 = scalar_lea.sflag [#allocation4], %s1350
          %s1352 = sand.u32 %s187, 1
          %s1353 = smul.addr %s1352, 104
          %s1354 = scalar_lea.vmem [#allocation10], %s1353
          %1355 = dma.done %s1351, 1664
        $region76: #{tpu_custom_call.1} parent=71 // pred_fallthru
          _
      $region72: #{tpu_custom_call.1} parent=5 // pred_fallthru
        _
    $region6: #{tpu_custom_call.1} parent=1 // loop_footer
      %s25 = sadd.s32 1, %s21
    $region7: #{tpu_custom_call.1} parent=1 // loop_footer_branch
      %20 = sbr.rel target = $region3
    $region8: #{tpu_custom_call.1} parent=1 // loop_exit
      _
    %1356 = vsyncpa [#allocation3], 1
    %s1357 = scalar_lea.sflag [#allocation3], 1
    %1358 = vsyncpa %s1357, 1
    %1359 = vsyncpa [#allocation6], 1
    %1360 = vsyncpa [#allocation9], 1
    %1361 = vsyncpa [#allocation4], 1
    %s1362 = scalar_lea.sflag [#allocation4], 1
    %1363 = vsyncpa %s1362, 1

</llo_original>
